<compile_context>
chip_gen: v7x
topology: tpu7x:2x2x1
jax: 0.10.0
libtpu: 0.0.40
codegen_flags: <defaults>
</compile_context>

<pallas_src>
from functools import partial

import jax
import jax.numpy as jnp
from jax.experimental import pallas as pl
from jax.experimental.pallas import tpu as pltpu

BN_EPS = 1e-5


def _ghost_bottleneck_kernel(x_ref, w1_ref, wc1_ref, wc2_ref, dw1_ref, dw2_ref,
                             b_ref, o_ref, *, H, W):
    """One image per grid step, channel-major (C, H*W) layout, f32 math in-kernel."""
    HW = H * W
    ch1 = w1_ref.shape[0]      # (c2 // 2) // 2
    c_half = wc1_ref.shape[0]  # c2 // 2

    x = x_ref[0].astype(jnp.float32)                       # (c1, HW)

    # Boundary masks for the 5x5 / pad-2 depthwise convs, built once per step and
    # shared by both convs. (1, HW) each -> lane resident, broadcast over channels.
    pos = jax.lax.broadcasted_iota(jnp.int32, (1, HW), 1)  # flat pixel index
    col = pos % W                                          # column index
    masks = []
    for oy in range(-2, 3):
        for ox in range(-2, 3):
            valid = ((pos >= (-oy) * W) & (pos < (H - oy) * W)   # row in range
                     & (col >= -ox) & (col < W - ox))            # col in range
            masks.append(valid.astype(jnp.float32))

    def dw5x5(act, taps):
        """5x5 depthwise conv, stride 1, pad 2. act: (C, HW) f32, taps: (C, 25) f32
        with BN scale folded. Shifted windows = XLU lane rotations + masks."""
        acc = jnp.zeros(act.shape, jnp.float32)
        for oy in range(-2, 3):
            for ox in range(-2, 3):
                t = (oy + 2) * 5 + (ox + 2)
                s = oy * W + ox                              # flat spatial offset
                shifted = act if s == 0 else pltpu.roll(act, (-s) % HW, 1)
                acc = acc + shifted * masks[t] * taps[:, t:t + 1]
        return acc

    # GhostConv1.cv1 : 1x1 conv over all c1 channels (folded BN) + SiLU -> (ch1, HW)
    y1 = (jnp.dot(w1_ref[...], x, preferred_element_type=jnp.float32)
          + b_ref[:ch1, 0:1])
    y1 = y1 * jax.nn.sigmoid(y1)

    # GhostConv1.cv2 : 5x5 depthwise (folded BN) + SiLU -> (ch1, HW)
    y2 = dw5x5(y1, dw1_ref[...]) + b_ref[:ch1, 1:2]
    y2 = y2 * jax.nn.sigmoid(y2)

    # GhostConv2.cv1 : 1x1 conv over g1 = concat(y1, y2) (folded BN), no act.
    # Split-weight form avoids the sublane concat: Wc @ g1 == Wc1 @ y1 + Wc2 @ y2.
    z1 = (jnp.dot(wc1_ref[...], y1, preferred_element_type=jnp.float32)
          + jnp.dot(wc2_ref[...], y2, preferred_element_type=jnp.float32)
          + b_ref[:, 2:3])                                   # (c_half, HW)

    # GhostConv2.cv2 : 5x5 depthwise (folded BN), no activation -> (c_half, HW)
    z2 = dw5x5(z1, dw2_ref[...]) + b_ref[:, 3:4]

    # out = concat(z1, z2) + x (identity shortcut, s == 1): single full-block,
    # lane-dense store of the (c2, HW) slab.
    out = jnp.concatenate([z1 + x[:c_half], z2 + x[c_half:]], axis=0)
    o_ref[0] = out.astype(o_ref.dtype)


def _fold_bn(w_oihw, bn):
    """Fold eval-mode BatchNorm (running stats) into conv weight + bias."""
    scale = bn["gamma"] / jnp.sqrt(bn["var"] + BN_EPS)
    bias = bn["beta"] - bn["mean"] * scale
    return w_oihw * scale.reshape(-1, 1, 1, 1), bias


def ghost_bottleneck_forward(x_nchw, params):
    """GhostBottleneck(c1, c2, k=3, s=1) eval forward.  x_nchw: (N, c1, H, W).

    Activations are streamed as bf16 (HBM bytes halved); returns (N, c2, H, W) bf16.
    """
    n, c1, h, w = x_nchw.shape
    hw = h * w
    ch1 = params["g1_cv1_w"].shape[0]       # (c2 // 2) // 2
    c_half = params["g2_cv1_w"].shape[0]    # c2 // 2
    c2 = 2 * c_half
    assert c1 == c2, "stride-1 GhostBottleneck needs c1 == c2 (identity shortcut)"
    assert 2 * ch1 == c_half, "c2 must be divisible by 4 (GhostConv halves twice)"

    # Fold eval-mode BN into the conv weights/biases (exact rewrite of the module).
    wa4, ba = _fold_bn(params["g1_cv1_w"], params["g1_cv1_bn"])
    wb4, bb = _fold_bn(params["g1_cv2_w"], params["g1_cv2_bn"])
    wc4, bc = _fold_bn(params["g2_cv1_w"], params["g2_cv1_bn"])
    wd4, bd = _fold_bn(params["g2_cv2_w"], params["g2_cv2_bn"])

    w1 = wa4.reshape(ch1, c1)                    # (ch1, c1): y = W @ x in CHW layout
    dw1 = wb4.reshape(ch1, 25)                   # channel-major 5x5 taps
    wc = wc4.reshape(c_half, c_half)             # (out, in)
    wc1, wc2 = wc[:, :ch1], wc[:, ch1:]          # split weights for concat-free dot
    dw2 = wd4.reshape(c_half, 25)
    bias = jnp.zeros((c_half, 4), jnp.float32)   # all four folded biases, one operand
    bias = (bias.at[:ch1, 0].set(ba).at[:ch1, 1].set(bb)
                .at[:, 2].set(bc).at[:, 3].set(bd))

    # NCHW -> channel-major (N, C, H*W): pure reshape, no transpose/relayout.
    # TODO(synk): in a full network the producer should already emit bf16 CHW-flat.
    x_flat = x_nchw.reshape(n, c1, hw).astype(jnp.bfloat16)

    def const(arr):
        return pl.BlockSpec(arr.shape, lambda b: (0, 0))

    out = pl.pallas_call(
        partial(_ghost_bottleneck_kernel, H=h, W=w),
        out_shape=jax.ShapeDtypeStruct((n, c2, hw), jnp.bfloat16),
        grid_spec=pltpu.PrefetchScalarGridSpec(
            num_scalar_prefetch=0,
            grid=(n,),
            in_specs=[
                pl.BlockSpec((1, c1, hw), lambda b: (b, 0, 0)),   # x (bf16)
                const(w1), const(wc1), const(wc2),                # pointwise weights
                const(dw1), const(dw2),                           # depthwise taps
                const(bias),                                      # packed biases
            ],
            out_specs=pl.BlockSpec((1, c2, hw), lambda b: (b, 0, 0)),
        ),
        compiler_params=pltpu.CompilerParams(
            dimension_semantics=("parallel",),   # batch across TCs (v7x dual-core)
            # Working set here is tiny; raise (<=96 MiB on v5e/v6e, <=48 MiB on
            # v7x's 64 MiB VMEM) once spatial tiles / multi-image blocks are used.
            vmem_limit_bytes=32 * 1024 * 1024,
        ),
    )(x_flat, w1, wc1, wc2, dw1, dw2, bias)

    return out.reshape(n, c2, h, w)


def init_params(key, c1, c2):
    c_half = c2 // 2
    ch1 = c_half // 2
    ks = jax.random.split(key, 8)

    def bn_params(k, c):
        k1, k2, k3, k4 = jax.random.split(k, 4)
        return {
            "gamma": 1.0 + 0.1 * jax.random.normal(k1, (c,), jnp.float32),
            "beta": 0.1 * jax.random.normal(k2, (c,), jnp.float32),
            "mean": 0.1 * jax.random.normal(k3, (c,), jnp.float32),
            "var": jnp.abs(1.0 + 0.1 * jax.random.normal(k4, (c,), jnp.float32)),
        }

    return {
        "g1_cv1_w": 0.1 * jax.random.normal(ks[0], (ch1, c1, 1, 1), jnp.float32),
        "g1_cv1_bn": bn_params(ks[1], ch1),
        "g1_cv2_w": 0.1 * jax.random.normal(ks[2], (ch1, 1, 5, 5), jnp.float32),
        "g1_cv2_bn": bn_params(ks[3], ch1),
        "g2_cv1_w": 0.1 * jax.random.normal(ks[4], (c_half, c_half, 1, 1), jnp.float32),
        "g2_cv1_bn": bn_params(ks[5], c_half),
        "g2_cv2_w": 0.1 * jax.random.normal(ks[6], (c_half, 1, 5, 5), jnp.float32),
        "g2_cv2_bn": bn_params(ks[7], c_half),
    }


def ghost_bottleneck_reference(x, params):
    """Pure-JAX/XLA reference mirroring the PyTorch eval forward (s == 1)."""
    def conv_bn(inp, w, bn, act, groups=1):
        pad = w.shape[2] // 2
        y = jax.lax.conv_general_dilated(
            inp, w, window_strides=(1, 1),
            padding=[(pad, pad), (pad, pad)],
            dimension_numbers=("NCHW", "OIHW", "NCHW"),
            feature_group_count=groups)
        scale = (bn["gamma"] / jnp.sqrt(bn["var"] + BN_EPS)).reshape(1, -1, 1, 1)
        bias = (bn["beta"] - bn["mean"] * bn["gamma"]
                / jnp.sqrt(bn["var"] + BN_EPS)).reshape(1, -1, 1, 1)
        y = y * scale + bias
        return y * jax.nn.sigmoid(y) if act else y

    ch1 = params["g1_cv1_w"].shape[0]
    c_half = params["g2_cv1_w"].shape[0]
    y1 = conv_bn(x, params["g1_cv1_w"], params["g1_cv1_bn"], act=True)
    y2 = conv_bn(y1, params["g1_cv2_w"], params["g1_cv2_bn"], act=True, groups=ch1)
    g1 = jnp.concatenate([y1, y2], axis=1)
    z1 = conv_bn(g1, params["g2_cv1_w"], params["g2_cv1_bn"], act=False)
    z2 = conv_bn(z1, params["g2_cv2_w"], params["g2_cv2_bn"], act=False, groups=c_half)
    return jnp.concatenate([z1, z2], axis=1) + x


if __name__ == "__main__":
    key = jax.random.PRNGKey(0)
    c1 = c2 = 16            # stride-1 GhostBottleneck requires c1 == c2
    N, H, W = 2, 16, 16

    kx, kp = jax.random.split(key)
    x = jax.random.normal(kx, (N, c1, H, W), jnp.float32)
    params = init_params(kp, c1, c2)

    out = ghost_bottleneck_forward(x, params)
    out = jax.block_until_ready(out)

    ref = ghost_bottleneck_reference(x, params)
    assert out.shape == (N, c2, H, W)
    # Activations stream as bf16 -> compare at bf16-appropriate tolerance.
    assert jnp.allclose(out.astype(jnp.float32), ref, atol=3e-2, rtol=2e-2), \
        "mismatch vs reference"

    print("KERNEL_OK")
</pallas_src>

<mosaic_0001>
module attributes {stable_mosaic.version = 11 : i64} {
  func.func @_ghost_bottleneck_kernel(%arg0: i32, %arg1: memref<1x16x256xbf16, #tpu.memory_space<vmem>>, %arg2: memref<4x16xf32, #tpu.memory_space<vmem>>, %arg3: memref<8x4xf32, #tpu.memory_space<vmem>>, %arg4: memref<8x4xf32, #tpu.memory_space<vmem>>, %arg5: memref<4x25xf32, #tpu.memory_space<vmem>>, %arg6: memref<8x25xf32, #tpu.memory_space<vmem>>, %arg7: memref<8x4xf32, #tpu.memory_space<vmem>>, %arg8: memref<1x16x256xbf16, #tpu.memory_space<vmem>>) attributes {dimension_semantics = [#tpu.dimension_semantics<parallel>], iteration_bounds = array<i64: 2>, scalar_prefetch = 0 : i64, scratch_operands = 0 : i64, tpu.core_type = #tpu.core_type<tc>, window_params = [{transform_indices = @transform_0, window_bounds = array<i64: 1, 16, 256>}, {pipeline_mode = #tpu.pipeline_mode<synchronous>, transform_indices = @transform_1, window_bounds = array<i64: 4, 16>}, {pipeline_mode = #tpu.pipeline_mode<synchronous>, transform_indices = @transform_2, window_bounds = array<i64: 8, 4>}, {pipeline_mode = #tpu.pipeline_mode<synchronous>, transform_indices = @transform_3, window_bounds = array<i64: 8, 4>}, {pipeline_mode = #tpu.pipeline_mode<synchronous>, transform_indices = @transform_4, window_bounds = array<i64: 4, 25>}, {pipeline_mode = #tpu.pipeline_mode<synchronous>, transform_indices = @transform_5, window_bounds = array<i64: 8, 25>}, {pipeline_mode = #tpu.pipeline_mode<synchronous>, transform_indices = @transform_6, window_bounds = array<i64: 8, 4>}, {transform_indices = @transform_7, window_bounds = array<i64: 1, 16, 256>}]} {
    %c0 = arith.constant 0 : index
    %c0_0 = arith.constant 0 : index
    %c0_1 = arith.constant 0 : index
    %0 = vector.load %arg1[%c0, %c0_0, %c0_1] : memref<1x16x256xbf16, #tpu.memory_space<vmem>>, vector<1x16x256xbf16>
    %1 = vector.shape_cast %0 : vector<1x16x256xbf16> to vector<16x256xbf16>
    %2 = arith.extf %1 : vector<16x256xbf16> to vector<16x256xf32>
    %3 = tpu.iota {dimensions = array<i32: 1>} : vector<1x256xi32>
    %c16_i32 = arith.constant 16 : i32
    %c0_i32 = arith.constant 0 : i32
    %4 = arith.cmpi eq, %c16_i32, %c0_i32 : i32
    %c1_i32 = arith.constant 1 : i32
    %5 = arith.select %4, %c1_i32, %c16_i32 : i32
    %6 = vector.broadcast %5 : i32 to vector<1x256xi32>
    %7 = arith.remsi %3, %6 : vector<1x256xi32>
    %c0_i32_2 = arith.constant 0 : i32
    %8 = vector.broadcast %c0_i32_2 : i32 to vector<1x256xi32>
    %9 = arith.cmpi ne, %7, %8 : vector<1x256xi32>
    %c0_i32_3 = arith.constant 0 : i32
    %10 = vector.broadcast %c0_i32_3 : i32 to vector<1x256xi32>
    %11 = arith.cmpi slt, %7, %10 : vector<1x256xi32>
    %c0_i32_4 = arith.constant 0 : i32
    %12 = arith.cmpi slt, %5, %c0_i32_4 : i32
    %13 = vector.broadcast %12 : i1 to vector<1x256xi1>
    %14 = vector.broadcast %13 : vector<1x256xi1> to vector<1x256xi1>
    %15 = arith.xori %11, %14 : vector<1x256xi1>
    %16 = arith.andi %15, %9 : vector<1x256xi1>
    %17 = vector.broadcast %5 : i32 to vector<1x256xi32>
    %18 = arith.addi %7, %17 : vector<1x256xi32>
    %19 = arith.select %16, %18, %7 : vector<1x256xi1>, vector<1x256xi32>
    %c32_i32 = arith.constant 32 : i32
    %20 = vector.broadcast %c32_i32 : i32 to vector<1x256xi32>
    %21 = arith.cmpi sge, %3, %20 : vector<1x256xi32>
    %c288_i32 = arith.constant 288 : i32
    %22 = vector.broadcast %c288_i32 : i32 to vector<1x256xi32>
    %23 = arith.cmpi slt, %3, %22 : vector<1x256xi32>
    %24 = arith.andi %21, %23 : vector<1x256xi1>
    %c2_i32 = arith.constant 2 : i32
    %25 = vector.broadcast %c2_i32 : i32 to vector<1x256xi32>
    %26 = arith.cmpi sge, %19, %25 : vector<1x256xi32>
    %27 = arith.andi %24, %26 : vector<1x256xi1>
    %c18_i32 = arith.constant 18 : i32
    %28 = vector.broadcast %c18_i32 : i32 to vector<1x256xi32>
    %29 = arith.cmpi slt, %19, %28 : vector<1x256xi32>
    %30 = arith.andi %27, %29 : vector<1x256xi1>
    %31 = arith.extui %30 : vector<1x256xi1> to vector<1x256xi32>
    %32 = arith.sitofp %31 : vector<1x256xi32> to vector<1x256xf32>
    %c32_i32_5 = arith.constant 32 : i32
    %33 = vector.broadcast %c32_i32_5 : i32 to vector<1x256xi32>
    %34 = arith.cmpi sge, %3, %33 : vector<1x256xi32>
    %c288_i32_6 = arith.constant 288 : i32
    %35 = vector.broadcast %c288_i32_6 : i32 to vector<1x256xi32>
    %36 = arith.cmpi slt, %3, %35 : vector<1x256xi32>
    %37 = arith.andi %34, %36 : vector<1x256xi1>
    %c1_i32_7 = arith.constant 1 : i32
    %38 = vector.broadcast %c1_i32_7 : i32 to vector<1x256xi32>
    %39 = arith.cmpi sge, %19, %38 : vector<1x256xi32>
    %40 = arith.andi %37, %39 : vector<1x256xi1>
    %c17_i32 = arith.constant 17 : i32
    %41 = vector.broadcast %c17_i32 : i32 to vector<1x256xi32>
    %42 = arith.cmpi slt, %19, %41 : vector<1x256xi32>
    %43 = arith.andi %40, %42 : vector<1x256xi1>
    %44 = arith.extui %43 : vector<1x256xi1> to vector<1x256xi32>
    %45 = arith.sitofp %44 : vector<1x256xi32> to vector<1x256xf32>
    %c32_i32_8 = arith.constant 32 : i32
    %46 = vector.broadcast %c32_i32_8 : i32 to vector<1x256xi32>
    %47 = arith.cmpi sge, %3, %46 : vector<1x256xi32>
    %c288_i32_9 = arith.constant 288 : i32
    %48 = vector.broadcast %c288_i32_9 : i32 to vector<1x256xi32>
    %49 = arith.cmpi slt, %3, %48 : vector<1x256xi32>
    %50 = arith.andi %47, %49 : vector<1x256xi1>
    %c0_i32_10 = arith.constant 0 : i32
    %51 = vector.broadcast %c0_i32_10 : i32 to vector<1x256xi32>
    %52 = arith.cmpi sge, %19, %51 : vector<1x256xi32>
    %53 = arith.andi %50, %52 : vector<1x256xi1>
    %c16_i32_11 = arith.constant 16 : i32
    %54 = vector.broadcast %c16_i32_11 : i32 to vector<1x256xi32>
    %55 = arith.cmpi slt, %19, %54 : vector<1x256xi32>
    %56 = arith.andi %53, %55 : vector<1x256xi1>
    %57 = arith.extui %56 : vector<1x256xi1> to vector<1x256xi32>
    %58 = arith.sitofp %57 : vector<1x256xi32> to vector<1x256xf32>
    %c32_i32_12 = arith.constant 32 : i32
    %59 = vector.broadcast %c32_i32_12 : i32 to vector<1x256xi32>
    %60 = arith.cmpi sge, %3, %59 : vector<1x256xi32>
    %c288_i32_13 = arith.constant 288 : i32
    %61 = vector.broadcast %c288_i32_13 : i32 to vector<1x256xi32>
    %62 = arith.cmpi slt, %3, %61 : vector<1x256xi32>
    %63 = arith.andi %60, %62 : vector<1x256xi1>
    %c-1_i32 = arith.constant -1 : i32
    %64 = vector.broadcast %c-1_i32 : i32 to vector<1x256xi32>
    %65 = arith.cmpi sge, %19, %64 : vector<1x256xi32>
    %66 = arith.andi %63, %65 : vector<1x256xi1>
    %c15_i32 = arith.constant 15 : i32
    %67 = vector.broadcast %c15_i32 : i32 to vector<1x256xi32>
    %68 = arith.cmpi slt, %19, %67 : vector<1x256xi32>
    %69 = arith.andi %66, %68 : vector<1x256xi1>
    %70 = arith.extui %69 : vector<1x256xi1> to vector<1x256xi32>
    %71 = arith.sitofp %70 : vector<1x256xi32> to vector<1x256xf32>
    %c32_i32_14 = arith.constant 32 : i32
    %72 = vector.broadcast %c32_i32_14 : i32 to vector<1x256xi32>
    %73 = arith.cmpi sge, %3, %72 : vector<1x256xi32>
    %c288_i32_15 = arith.constant 288 : i32
    %74 = vector.broadcast %c288_i32_15 : i32 to vector<1x256xi32>
    %75 = arith.cmpi slt, %3, %74 : vector<1x256xi32>
    %76 = arith.andi %73, %75 : vector<1x256xi1>
    %c-2_i32 = arith.constant -2 : i32
    %77 = vector.broadcast %c-2_i32 : i32 to vector<1x256xi32>
    %78 = arith.cmpi sge, %19, %77 : vector<1x256xi32>
    %79 = arith.andi %76, %78 : vector<1x256xi1>
    %c14_i32 = arith.constant 14 : i32
    %80 = vector.broadcast %c14_i32 : i32 to vector<1x256xi32>
    %81 = arith.cmpi slt, %19, %80 : vector<1x256xi32>
    %82 = arith.andi %79, %81 : vector<1x256xi1>
    %83 = arith.extui %82 : vector<1x256xi1> to vector<1x256xi32>
    %84 = arith.sitofp %83 : vector<1x256xi32> to vector<1x256xf32>
    %c16_i32_16 = arith.constant 16 : i32
    %85 = vector.broadcast %c16_i32_16 : i32 to vector<1x256xi32>
    %86 = arith.cmpi sge, %3, %85 : vector<1x256xi32>
    %c272_i32 = arith.constant 272 : i32
    %87 = vector.broadcast %c272_i32 : i32 to vector<1x256xi32>
    %88 = arith.cmpi slt, %3, %87 : vector<1x256xi32>
    %89 = arith.andi %86, %88 : vector<1x256xi1>
    %c2_i32_17 = arith.constant 2 : i32
    %90 = vector.broadcast %c2_i32_17 : i32 to vector<1x256xi32>
    %91 = arith.cmpi sge, %19, %90 : vector<1x256xi32>
    %92 = arith.andi %89, %91 : vector<1x256xi1>
    %c18_i32_18 = arith.constant 18 : i32
    %93 = vector.broadcast %c18_i32_18 : i32 to vector<1x256xi32>
    %94 = arith.cmpi slt, %19, %93 : vector<1x256xi32>
    %95 = arith.andi %92, %94 : vector<1x256xi1>
    %96 = arith.extui %95 : vector<1x256xi1> to vector<1x256xi32>
    %97 = arith.sitofp %96 : vector<1x256xi32> to vector<1x256xf32>
    %c16_i32_19 = arith.constant 16 : i32
    %98 = vector.broadcast %c16_i32_19 : i32 to vector<1x256xi32>
    %99 = arith.cmpi sge, %3, %98 : vector<1x256xi32>
    %c272_i32_20 = arith.constant 272 : i32
    %100 = vector.broadcast %c272_i32_20 : i32 to vector<1x256xi32>
    %101 = arith.cmpi slt, %3, %100 : vector<1x256xi32>
    %102 = arith.andi %99, %101 : vector<1x256xi1>
    %c1_i32_21 = arith.constant 1 : i32
    %103 = vector.broadcast %c1_i32_21 : i32 to vector<1x256xi32>
    %104 = arith.cmpi sge, %19, %103 : vector<1x256xi32>
    %105 = arith.andi %102, %104 : vector<1x256xi1>
    %c17_i32_22 = arith.constant 17 : i32
    %106 = vector.broadcast %c17_i32_22 : i32 to vector<1x256xi32>
    %107 = arith.cmpi slt, %19, %106 : vector<1x256xi32>
    %108 = arith.andi %105, %107 : vector<1x256xi1>
    %109 = arith.extui %108 : vector<1x256xi1> to vector<1x256xi32>
    %110 = arith.sitofp %109 : vector<1x256xi32> to vector<1x256xf32>
    %c16_i32_23 = arith.constant 16 : i32
    %111 = vector.broadcast %c16_i32_23 : i32 to vector<1x256xi32>
    %112 = arith.cmpi sge, %3, %111 : vector<1x256xi32>
    %c272_i32_24 = arith.constant 272 : i32
    %113 = vector.broadcast %c272_i32_24 : i32 to vector<1x256xi32>
    %114 = arith.cmpi slt, %3, %113 : vector<1x256xi32>
    %115 = arith.andi %112, %114 : vector<1x256xi1>
    %c0_i32_25 = arith.constant 0 : i32
    %116 = vector.broadcast %c0_i32_25 : i32 to vector<1x256xi32>
    %117 = arith.cmpi sge, %19, %116 : vector<1x256xi32>
    %118 = arith.andi %115, %117 : vector<1x256xi1>
    %c16_i32_26 = arith.constant 16 : i32
    %119 = vector.broadcast %c16_i32_26 : i32 to vector<1x256xi32>
    %120 = arith.cmpi slt, %19, %119 : vector<1x256xi32>
    %121 = arith.andi %118, %120 : vector<1x256xi1>
    %122 = arith.extui %121 : vector<1x256xi1> to vector<1x256xi32>
    %123 = arith.sitofp %122 : vector<1x256xi32> to vector<1x256xf32>
    %c16_i32_27 = arith.constant 16 : i32
    %124 = vector.broadcast %c16_i32_27 : i32 to vector<1x256xi32>
    %125 = arith.cmpi sge, %3, %124 : vector<1x256xi32>
    %c272_i32_28 = arith.constant 272 : i32
    %126 = vector.broadcast %c272_i32_28 : i32 to vector<1x256xi32>
    %127 = arith.cmpi slt, %3, %126 : vector<1x256xi32>
    %128 = arith.andi %125, %127 : vector<1x256xi1>
    %c-1_i32_29 = arith.constant -1 : i32
    %129 = vector.broadcast %c-1_i32_29 : i32 to vector<1x256xi32>
    %130 = arith.cmpi sge, %19, %129 : vector<1x256xi32>
    %131 = arith.andi %128, %130 : vector<1x256xi1>
    %c15_i32_30 = arith.constant 15 : i32
    %132 = vector.broadcast %c15_i32_30 : i32 to vector<1x256xi32>
    %133 = arith.cmpi slt, %19, %132 : vector<1x256xi32>
    %134 = arith.andi %131, %133 : vector<1x256xi1>
    %135 = arith.extui %134 : vector<1x256xi1> to vector<1x256xi32>
    %136 = arith.sitofp %135 : vector<1x256xi32> to vector<1x256xf32>
    %c16_i32_31 = arith.constant 16 : i32
    %137 = vector.broadcast %c16_i32_31 : i32 to vector<1x256xi32>
    %138 = arith.cmpi sge, %3, %137 : vector<1x256xi32>
    %c272_i32_32 = arith.constant 272 : i32
    %139 = vector.broadcast %c272_i32_32 : i32 to vector<1x256xi32>
    %140 = arith.cmpi slt, %3, %139 : vector<1x256xi32>
    %141 = arith.andi %138, %140 : vector<1x256xi1>
    %c-2_i32_33 = arith.constant -2 : i32
    %142 = vector.broadcast %c-2_i32_33 : i32 to vector<1x256xi32>
    %143 = arith.cmpi sge, %19, %142 : vector<1x256xi32>
    %144 = arith.andi %141, %143 : vector<1x256xi1>
    %c14_i32_34 = arith.constant 14 : i32
    %145 = vector.broadcast %c14_i32_34 : i32 to vector<1x256xi32>
    %146 = arith.cmpi slt, %19, %145 : vector<1x256xi32>
    %147 = arith.andi %144, %146 : vector<1x256xi1>
    %148 = arith.extui %147 : vector<1x256xi1> to vector<1x256xi32>
    %149 = arith.sitofp %148 : vector<1x256xi32> to vector<1x256xf32>
    %c0_i32_35 = arith.constant 0 : i32
    %150 = vector.broadcast %c0_i32_35 : i32 to vector<1x256xi32>
    %151 = arith.cmpi sge, %3, %150 : vector<1x256xi32>
    %c256_i32 = arith.constant 256 : i32
    %152 = vector.broadcast %c256_i32 : i32 to vector<1x256xi32>
    %153 = arith.cmpi slt, %3, %152 : vector<1x256xi32>
    %154 = arith.andi %151, %153 : vector<1x256xi1>
    %c2_i32_36 = arith.constant 2 : i32
    %155 = vector.broadcast %c2_i32_36 : i32 to vector<1x256xi32>
    %156 = arith.cmpi sge, %19, %155 : vector<1x256xi32>
    %157 = arith.andi %154, %156 : vector<1x256xi1>
    %c18_i32_37 = arith.constant 18 : i32
    %158 = vector.broadcast %c18_i32_37 : i32 to vector<1x256xi32>
    %159 = arith.cmpi slt, %19, %158 : vector<1x256xi32>
    %160 = arith.andi %157, %159 : vector<1x256xi1>
    %161 = arith.extui %160 : vector<1x256xi1> to vector<1x256xi32>
    %162 = arith.sitofp %161 : vector<1x256xi32> to vector<1x256xf32>
    %c0_i32_38 = arith.constant 0 : i32
    %163 = vector.broadcast %c0_i32_38 : i32 to vector<1x256xi32>
    %164 = arith.cmpi sge, %3, %163 : vector<1x256xi32>
    %c256_i32_39 = arith.constant 256 : i32
    %165 = vector.broadcast %c256_i32_39 : i32 to vector<1x256xi32>
    %166 = arith.cmpi slt, %3, %165 : vector<1x256xi32>
    %167 = arith.andi %164, %166 : vector<1x256xi1>
    %c1_i32_40 = arith.constant 1 : i32
    %168 = vector.broadcast %c1_i32_40 : i32 to vector<1x256xi32>
    %169 = arith.cmpi sge, %19, %168 : vector<1x256xi32>
    %170 = arith.andi %167, %169 : vector<1x256xi1>
    %c17_i32_41 = arith.constant 17 : i32
    %171 = vector.broadcast %c17_i32_41 : i32 to vector<1x256xi32>
    %172 = arith.cmpi slt, %19, %171 : vector<1x256xi32>
    %173 = arith.andi %170, %172 : vector<1x256xi1>
    %174 = arith.extui %173 : vector<1x256xi1> to vector<1x256xi32>
    %175 = arith.sitofp %174 : vector<1x256xi32> to vector<1x256xf32>
    %c0_i32_42 = arith.constant 0 : i32
    %176 = vector.broadcast %c0_i32_42 : i32 to vector<1x256xi32>
    %177 = arith.cmpi sge, %3, %176 : vector<1x256xi32>
    %c256_i32_43 = arith.constant 256 : i32
    %178 = vector.broadcast %c256_i32_43 : i32 to vector<1x256xi32>
    %179 = arith.cmpi slt, %3, %178 : vector<1x256xi32>
    %180 = arith.andi %177, %179 : vector<1x256xi1>
    %c0_i32_44 = arith.constant 0 : i32
    %181 = vector.broadcast %c0_i32_44 : i32 to vector<1x256xi32>
    %182 = arith.cmpi sge, %19, %181 : vector<1x256xi32>
    %183 = arith.andi %180, %182 : vector<1x256xi1>
    %c16_i32_45 = arith.constant 16 : i32
    %184 = vector.broadcast %c16_i32_45 : i32 to vector<1x256xi32>
    %185 = arith.cmpi slt, %19, %184 : vector<1x256xi32>
    %186 = arith.andi %183, %185 : vector<1x256xi1>
    %187 = arith.extui %186 : vector<1x256xi1> to vector<1x256xi32>
    %188 = arith.sitofp %187 : vector<1x256xi32> to vector<1x256xf32>
    %c0_i32_46 = arith.constant 0 : i32
    %189 = vector.broadcast %c0_i32_46 : i32 to vector<1x256xi32>
    %190 = arith.cmpi sge, %3, %189 : vector<1x256xi32>
    %c256_i32_47 = arith.constant 256 : i32
    %191 = vector.broadcast %c256_i32_47 : i32 to vector<1x256xi32>
    %192 = arith.cmpi slt, %3, %191 : vector<1x256xi32>
    %193 = arith.andi %190, %192 : vector<1x256xi1>
    %c-1_i32_48 = arith.constant -1 : i32
    %194 = vector.broadcast %c-1_i32_48 : i32 to vector<1x256xi32>
    %195 = arith.cmpi sge, %19, %194 : vector<1x256xi32>
    %196 = arith.andi %193, %195 : vector<1x256xi1>
    %c15_i32_49 = arith.constant 15 : i32
    %197 = vector.broadcast %c15_i32_49 : i32 to vector<1x256xi32>
    %198 = arith.cmpi slt, %19, %197 : vector<1x256xi32>
    %199 = arith.andi %196, %198 : vector<1x256xi1>
    %200 = arith.extui %199 : vector<1x256xi1> to vector<1x256xi32>
    %201 = arith.sitofp %200 : vector<1x256xi32> to vector<1x256xf32>
    %c0_i32_50 = arith.constant 0 : i32
    %202 = vector.broadcast %c0_i32_50 : i32 to vector<1x256xi32>
    %203 = arith.cmpi sge, %3, %202 : vector<1x256xi32>
    %c256_i32_51 = arith.constant 256 : i32
    %204 = vector.broadcast %c256_i32_51 : i32 to vector<1x256xi32>
    %205 = arith.cmpi slt, %3, %204 : vector<1x256xi32>
    %206 = arith.andi %203, %205 : vector<1x256xi1>
    %c-2_i32_52 = arith.constant -2 : i32
    %207 = vector.broadcast %c-2_i32_52 : i32 to vector<1x256xi32>
    %208 = arith.cmpi sge, %19, %207 : vector<1x256xi32>
    %209 = arith.andi %206, %208 : vector<1x256xi1>
    %c14_i32_53 = arith.constant 14 : i32
    %210 = vector.broadcast %c14_i32_53 : i32 to vector<1x256xi32>
    %211 = arith.cmpi slt, %19, %210 : vector<1x256xi32>
    %212 = arith.andi %209, %211 : vector<1x256xi1>
    %213 = arith.extui %212 : vector<1x256xi1> to vector<1x256xi32>
    %214 = arith.sitofp %213 : vector<1x256xi32> to vector<1x256xf32>
    %c-16_i32 = arith.constant -16 : i32
    %215 = vector.broadcast %c-16_i32 : i32 to vector<1x256xi32>
    %216 = arith.cmpi sge, %3, %215 : vector<1x256xi32>
    %c240_i32 = arith.constant 240 : i32
    %217 = vector.broadcast %c240_i32 : i32 to vector<1x256xi32>
    %218 = arith.cmpi slt, %3, %217 : vector<1x256xi32>
    %219 = arith.andi %216, %218 : vector<1x256xi1>
    %c2_i32_54 = arith.constant 2 : i32
    %220 = vector.broadcast %c2_i32_54 : i32 to vector<1x256xi32>
    %221 = arith.cmpi sge, %19, %220 : vector<1x256xi32>
    %222 = arith.andi %219, %221 : vector<1x256xi1>
    %c18_i32_55 = arith.constant 18 : i32
    %223 = vector.broadcast %c18_i32_55 : i32 to vector<1x256xi32>
    %224 = arith.cmpi slt, %19, %223 : vector<1x256xi32>
    %225 = arith.andi %222, %224 : vector<1x256xi1>
    %226 = arith.extui %225 : vector<1x256xi1> to vector<1x256xi32>
    %227 = arith.sitofp %226 : vector<1x256xi32> to vector<1x256xf32>
    %c-16_i32_56 = arith.constant -16 : i32
    %228 = vector.broadcast %c-16_i32_56 : i32 to vector<1x256xi32>
    %229 = arith.cmpi sge, %3, %228 : vector<1x256xi32>
    %c240_i32_57 = arith.constant 240 : i32
    %230 = vector.broadcast %c240_i32_57 : i32 to vector<1x256xi32>
    %231 = arith.cmpi slt, %3, %230 : vector<1x256xi32>
    %232 = arith.andi %229, %231 : vector<1x256xi1>
    %c1_i32_58 = arith.constant 1 : i32
    %233 = vector.broadcast %c1_i32_58 : i32 to vector<1x256xi32>
    %234 = arith.cmpi sge, %19, %233 : vector<1x256xi32>
    %235 = arith.andi %232, %234 : vector<1x256xi1>
    %c17_i32_59 = arith.constant 17 : i32
    %236 = vector.broadcast %c17_i32_59 : i32 to vector<1x256xi32>
    %237 = arith.cmpi slt, %19, %236 : vector<1x256xi32>
    %238 = arith.andi %235, %237 : vector<1x256xi1>
    %239 = arith.extui %238 : vector<1x256xi1> to vector<1x256xi32>
    %240 = arith.sitofp %239 : vector<1x256xi32> to vector<1x256xf32>
    %c-16_i32_60 = arith.constant -16 : i32
    %241 = vector.broadcast %c-16_i32_60 : i32 to vector<1x256xi32>
    %242 = arith.cmpi sge, %3, %241 : vector<1x256xi32>
    %c240_i32_61 = arith.constant 240 : i32
    %243 = vector.broadcast %c240_i32_61 : i32 to vector<1x256xi32>
    %244 = arith.cmpi slt, %3, %243 : vector<1x256xi32>
    %245 = arith.andi %242, %244 : vector<1x256xi1>
    %c0_i32_62 = arith.constant 0 : i32
    %246 = vector.broadcast %c0_i32_62 : i32 to vector<1x256xi32>
    %247 = arith.cmpi sge, %19, %246 : vector<1x256xi32>
    %248 = arith.andi %245, %247 : vector<1x256xi1>
    %c16_i32_63 = arith.constant 16 : i32
    %249 = vector.broadcast %c16_i32_63 : i32 to vector<1x256xi32>
    %250 = arith.cmpi slt, %19, %249 : vector<1x256xi32>
    %251 = arith.andi %248, %250 : vector<1x256xi1>
    %252 = arith.extui %251 : vector<1x256xi1> to vector<1x256xi32>
    %253 = arith.sitofp %252 : vector<1x256xi32> to vector<1x256xf32>
    %c-16_i32_64 = arith.constant -16 : i32
    %254 = vector.broadcast %c-16_i32_64 : i32 to vector<1x256xi32>
    %255 = arith.cmpi sge, %3, %254 : vector<1x256xi32>
    %c240_i32_65 = arith.constant 240 : i32
    %256 = vector.broadcast %c240_i32_65 : i32 to vector<1x256xi32>
    %257 = arith.cmpi slt, %3, %256 : vector<1x256xi32>
    %258 = arith.andi %255, %257 : vector<1x256xi1>
    %c-1_i32_66 = arith.constant -1 : i32
    %259 = vector.broadcast %c-1_i32_66 : i32 to vector<1x256xi32>
    %260 = arith.cmpi sge, %19, %259 : vector<1x256xi32>
    %261 = arith.andi %258, %260 : vector<1x256xi1>
    %c15_i32_67 = arith.constant 15 : i32
    %262 = vector.broadcast %c15_i32_67 : i32 to vector<1x256xi32>
    %263 = arith.cmpi slt, %19, %262 : vector<1x256xi32>
    %264 = arith.andi %261, %263 : vector<1x256xi1>
    %265 = arith.extui %264 : vector<1x256xi1> to vector<1x256xi32>
    %266 = arith.sitofp %265 : vector<1x256xi32> to vector<1x256xf32>
    %c-16_i32_68 = arith.constant -16 : i32
    %267 = vector.broadcast %c-16_i32_68 : i32 to vector<1x256xi32>
    %268 = arith.cmpi sge, %3, %267 : vector<1x256xi32>
    %c240_i32_69 = arith.constant 240 : i32
    %269 = vector.broadcast %c240_i32_69 : i32 to vector<1x256xi32>
    %270 = arith.cmpi slt, %3, %269 : vector<1x256xi32>
    %271 = arith.andi %268, %270 : vector<1x256xi1>
    %c-2_i32_70 = arith.constant -2 : i32
    %272 = vector.broadcast %c-2_i32_70 : i32 to vector<1x256xi32>
    %273 = arith.cmpi sge, %19, %272 : vector<1x256xi32>
    %274 = arith.andi %271, %273 : vector<1x256xi1>
    %c14_i32_71 = arith.constant 14 : i32
    %275 = vector.broadcast %c14_i32_71 : i32 to vector<1x256xi32>
    %276 = arith.cmpi slt, %19, %275 : vector<1x256xi32>
    %277 = arith.andi %274, %276 : vector<1x256xi1>
    %278 = arith.extui %277 : vector<1x256xi1> to vector<1x256xi32>
    %279 = arith.sitofp %278 : vector<1x256xi32> to vector<1x256xf32>
    %c-32_i32 = arith.constant -32 : i32
    %280 = vector.broadcast %c-32_i32 : i32 to vector<1x256xi32>
    %281 = arith.cmpi sge, %3, %280 : vector<1x256xi32>
    %c224_i32 = arith.constant 224 : i32
    %282 = vector.broadcast %c224_i32 : i32 to vector<1x256xi32>
    %283 = arith.cmpi slt, %3, %282 : vector<1x256xi32>
    %284 = arith.andi %281, %283 : vector<1x256xi1>
    %c2_i32_72 = arith.constant 2 : i32
    %285 = vector.broadcast %c2_i32_72 : i32 to vector<1x256xi32>
    %286 = arith.cmpi sge, %19, %285 : vector<1x256xi32>
    %287 = arith.andi %284, %286 : vector<1x256xi1>
    %c18_i32_73 = arith.constant 18 : i32
    %288 = vector.broadcast %c18_i32_73 : i32 to vector<1x256xi32>
    %289 = arith.cmpi slt, %19, %288 : vector<1x256xi32>
    %290 = arith.andi %287, %289 : vector<1x256xi1>
    %291 = arith.extui %290 : vector<1x256xi1> to vector<1x256xi32>
    %292 = arith.sitofp %291 : vector<1x256xi32> to vector<1x256xf32>
    %c-32_i32_74 = arith.constant -32 : i32
    %293 = vector.broadcast %c-32_i32_74 : i32 to vector<1x256xi32>
    %294 = arith.cmpi sge, %3, %293 : vector<1x256xi32>
    %c224_i32_75 = arith.constant 224 : i32
    %295 = vector.broadcast %c224_i32_75 : i32 to vector<1x256xi32>
    %296 = arith.cmpi slt, %3, %295 : vector<1x256xi32>
    %297 = arith.andi %294, %296 : vector<1x256xi1>
    %c1_i32_76 = arith.constant 1 : i32
    %298 = vector.broadcast %c1_i32_76 : i32 to vector<1x256xi32>
    %299 = arith.cmpi sge, %19, %298 : vector<1x256xi32>
    %300 = arith.andi %297, %299 : vector<1x256xi1>
    %c17_i32_77 = arith.constant 17 : i32
    %301 = vector.broadcast %c17_i32_77 : i32 to vector<1x256xi32>
    %302 = arith.cmpi slt, %19, %301 : vector<1x256xi32>
    %303 = arith.andi %300, %302 : vector<1x256xi1>
    %304 = arith.extui %303 : vector<1x256xi1> to vector<1x256xi32>
    %305 = arith.sitofp %304 : vector<1x256xi32> to vector<1x256xf32>
    %c-32_i32_78 = arith.constant -32 : i32
    %306 = vector.broadcast %c-32_i32_78 : i32 to vector<1x256xi32>
    %307 = arith.cmpi sge, %3, %306 : vector<1x256xi32>
    %c224_i32_79 = arith.constant 224 : i32
    %308 = vector.broadcast %c224_i32_79 : i32 to vector<1x256xi32>
    %309 = arith.cmpi slt, %3, %308 : vector<1x256xi32>
    %310 = arith.andi %307, %309 : vector<1x256xi1>
    %c0_i32_80 = arith.constant 0 : i32
    %311 = vector.broadcast %c0_i32_80 : i32 to vector<1x256xi32>
    %312 = arith.cmpi sge, %19, %311 : vector<1x256xi32>
    %313 = arith.andi %310, %312 : vector<1x256xi1>
    %c16_i32_81 = arith.constant 16 : i32
    %314 = vector.broadcast %c16_i32_81 : i32 to vector<1x256xi32>
    %315 = arith.cmpi slt, %19, %314 : vector<1x256xi32>
    %316 = arith.andi %313, %315 : vector<1x256xi1>
    %317 = arith.extui %316 : vector<1x256xi1> to vector<1x256xi32>
    %318 = arith.sitofp %317 : vector<1x256xi32> to vector<1x256xf32>
    %c-32_i32_82 = arith.constant -32 : i32
    %319 = vector.broadcast %c-32_i32_82 : i32 to vector<1x256xi32>
    %320 = arith.cmpi sge, %3, %319 : vector<1x256xi32>
    %c224_i32_83 = arith.constant 224 : i32
    %321 = vector.broadcast %c224_i32_83 : i32 to vector<1x256xi32>
    %322 = arith.cmpi slt, %3, %321 : vector<1x256xi32>
    %323 = arith.andi %320, %322 : vector<1x256xi1>
    %c-1_i32_84 = arith.constant -1 : i32
    %324 = vector.broadcast %c-1_i32_84 : i32 to vector<1x256xi32>
    %325 = arith.cmpi sge, %19, %324 : vector<1x256xi32>
    %326 = arith.andi %323, %325 : vector<1x256xi1>
    %c15_i32_85 = arith.constant 15 : i32
    %327 = vector.broadcast %c15_i32_85 : i32 to vector<1x256xi32>
    %328 = arith.cmpi slt, %19, %327 : vector<1x256xi32>
    %329 = arith.andi %326, %328 : vector<1x256xi1>
    %330 = arith.extui %329 : vector<1x256xi1> to vector<1x256xi32>
    %331 = arith.sitofp %330 : vector<1x256xi32> to vector<1x256xf32>
    %c-32_i32_86 = arith.constant -32 : i32
    %332 = vector.broadcast %c-32_i32_86 : i32 to vector<1x256xi32>
    %333 = arith.cmpi sge, %3, %332 : vector<1x256xi32>
    %c224_i32_87 = arith.constant 224 : i32
    %334 = vector.broadcast %c224_i32_87 : i32 to vector<1x256xi32>
    %335 = arith.cmpi slt, %3, %334 : vector<1x256xi32>
    %336 = arith.andi %333, %335 : vector<1x256xi1>
    %c-2_i32_88 = arith.constant -2 : i32
    %337 = vector.broadcast %c-2_i32_88 : i32 to vector<1x256xi32>
    %338 = arith.cmpi sge, %19, %337 : vector<1x256xi32>
    %339 = arith.andi %336, %338 : vector<1x256xi1>
    %c14_i32_89 = arith.constant 14 : i32
    %340 = vector.broadcast %c14_i32_89 : i32 to vector<1x256xi32>
    %341 = arith.cmpi slt, %19, %340 : vector<1x256xi32>
    %342 = arith.andi %339, %341 : vector<1x256xi1>
    %343 = arith.extui %342 : vector<1x256xi1> to vector<1x256xi32>
    %344 = arith.sitofp %343 : vector<1x256xi32> to vector<1x256xf32>
    %c0_90 = arith.constant 0 : index
    %c0_91 = arith.constant 0 : index
    %345 = vector.load %arg2[%c0_90, %c0_91] : memref<4x16xf32, #tpu.memory_space<vmem>>, vector<4x16xf32>
    %cst = arith.constant dense<0.000000e+00> : vector<4x256xf32>
    %346 = tpu.matmul %345, %2, %cst {dimension_numbers = #tpu.dot_dimension_numbers<[1], [0], [0], [1], [0, 0, 1, 1], [], []>} : vector<4x16xf32>, vector<16x256xf32>, vector<4x256xf32> -> vector<4x256xf32>
    %c0_92 = arith.constant 0 : index
    %c0_93 = arith.constant 0 : index
    %347 = vector.load %arg7[%c0_92, %c0_93] : memref<8x4xf32, #tpu.memory_space<vmem>>, vector<4x1xf32>
    %348 = vector.broadcast %347 : vector<4x1xf32> to vector<4x256xf32>
    %349 = arith.addf %346, %348 : vector<4x256xf32>
    %350 = arith.negf %349 : vector<4x256xf32>
    %351 = math.exp %350 : vector<4x256xf32>
    %cst_94 = arith.constant 1.000000e+00 : f32
    %352 = vector.broadcast %cst_94 : f32 to vector<4x256xf32>
    %353 = arith.addf %352, %351 : vector<4x256xf32>
    %354 = arith.divf %352, %353 : vector<4x256xf32>
    %355 = arith.mulf %349, %354 : vector<4x256xf32>
    %c0_95 = arith.constant 0 : index
    %c0_96 = arith.constant 0 : index
    %356 = vector.load %arg5[%c0_95, %c0_96] : memref<4x25xf32, #tpu.memory_space<vmem>>, vector<4x25xf32>
    %cst_97 = arith.constant 0.000000e+00 : f32
    %357 = vector.broadcast %cst_97 : f32 to vector<4x256xf32>
    %c34_i32 = arith.constant 34 : i32
    %358 = tpu.dynamic_rotate %355 by %c34_i32 dim 1 : vector<4x256xf32>, i32 -> vector<4x256xf32>
    %359 = vector.broadcast %32 : vector<1x256xf32> to vector<4x256xf32>
    %360 = arith.mulf %358, %359 : vector<4x256xf32>
    %361 = vector.extract_strided_slice %356 {offsets = [0, 0], sizes = [4, 1], strides = [1, 1]} : vector<4x25xf32> to vector<4x1xf32>
    %362 = vector.broadcast %361 : vector<4x1xf32> to vector<4x256xf32>
    %363 = arith.mulf %360, %362 : vector<4x256xf32>
    %364 = arith.addf %357, %363 : vector<4x256xf32>
    %c33_i32 = arith.constant 33 : i32
    %365 = tpu.dynamic_rotate %355 by %c33_i32 dim 1 : vector<4x256xf32>, i32 -> vector<4x256xf32>
    %366 = vector.broadcast %45 : vector<1x256xf32> to vector<4x256xf32>
    %367 = arith.mulf %365, %366 : vector<4x256xf32>
    %368 = vector.extract_strided_slice %356 {offsets = [0, 1], sizes = [4, 1], strides = [1, 1]} : vector<4x25xf32> to vector<4x1xf32>
    %369 = vector.broadcast %368 : vector<4x1xf32> to vector<4x256xf32>
    %370 = arith.mulf %367, %369 : vector<4x256xf32>
    %371 = arith.addf %364, %370 : vector<4x256xf32>
    %c32_i32_98 = arith.constant 32 : i32
    %372 = tpu.dynamic_rotate %355 by %c32_i32_98 dim 1 : vector<4x256xf32>, i32 -> vector<4x256xf32>
    %373 = vector.broadcast %58 : vector<1x256xf32> to vector<4x256xf32>
    %374 = arith.mulf %372, %373 : vector<4x256xf32>
    %375 = vector.extract_strided_slice %356 {offsets = [0, 2], sizes = [4, 1], strides = [1, 1]} : vector<4x25xf32> to vector<4x1xf32>
    %376 = vector.broadcast %375 : vector<4x1xf32> to vector<4x256xf32>
    %377 = arith.mulf %374, %376 : vector<4x256xf32>
    %378 = arith.addf %371, %377 : vector<4x256xf32>
    %c31_i32 = arith.constant 31 : i32
    %379 = tpu.dynamic_rotate %355 by %c31_i32 dim 1 : vector<4x256xf32>, i32 -> vector<4x256xf32>
    %380 = vector.broadcast %71 : vector<1x256xf32> to vector<4x256xf32>
    %381 = arith.mulf %379, %380 : vector<4x256xf32>
    %382 = vector.extract_strided_slice %356 {offsets = [0, 3], sizes = [4, 1], strides = [1, 1]} : vector<4x25xf32> to vector<4x1xf32>
    %383 = vector.broadcast %382 : vector<4x1xf32> to vector<4x256xf32>
    %384 = arith.mulf %381, %383 : vector<4x256xf32>
    %385 = arith.addf %378, %384 : vector<4x256xf32>
    %c30_i32 = arith.constant 30 : i32
    %386 = tpu.dynamic_rotate %355 by %c30_i32 dim 1 : vector<4x256xf32>, i32 -> vector<4x256xf32>
    %387 = vector.broadcast %84 : vector<1x256xf32> to vector<4x256xf32>
    %388 = arith.mulf %386, %387 : vector<4x256xf32>
    %389 = vector.extract_strided_slice %356 {offsets = [0, 4], sizes = [4, 1], strides = [1, 1]} : vector<4x25xf32> to vector<4x1xf32>
    %390 = vector.broadcast %389 : vector<4x1xf32> to vector<4x256xf32>
    %391 = arith.mulf %388, %390 : vector<4x256xf32>
    %392 = arith.addf %385, %391 : vector<4x256xf32>
    %c18_i32_99 = arith.constant 18 : i32
    %393 = tpu.dynamic_rotate %355 by %c18_i32_99 dim 1 : vector<4x256xf32>, i32 -> vector<4x256xf32>
    %394 = vector.broadcast %97 : vector<1x256xf32> to vector<4x256xf32>
    %395 = arith.mulf %393, %394 : vector<4x256xf32>
    %396 = vector.extract_strided_slice %356 {offsets = [0, 5], sizes = [4, 1], strides = [1, 1]} : vector<4x25xf32> to vector<4x1xf32>
    %397 = vector.broadcast %396 : vector<4x1xf32> to vector<4x256xf32>
    %398 = arith.mulf %395, %397 : vector<4x256xf32>
    %399 = arith.addf %392, %398 : vector<4x256xf32>
    %c17_i32_100 = arith.constant 17 : i32
    %400 = tpu.dynamic_rotate %355 by %c17_i32_100 dim 1 : vector<4x256xf32>, i32 -> vector<4x256xf32>
    %401 = vector.broadcast %110 : vector<1x256xf32> to vector<4x256xf32>
    %402 = arith.mulf %400, %401 : vector<4x256xf32>
    %403 = vector.extract_strided_slice %356 {offsets = [0, 6], sizes = [4, 1], strides = [1, 1]} : vector<4x25xf32> to vector<4x1xf32>
    %404 = vector.broadcast %403 : vector<4x1xf32> to vector<4x256xf32>
    %405 = arith.mulf %402, %404 : vector<4x256xf32>
    %406 = arith.addf %399, %405 : vector<4x256xf32>
    %c16_i32_101 = arith.constant 16 : i32
    %407 = tpu.dynamic_rotate %355 by %c16_i32_101 dim 1 : vector<4x256xf32>, i32 -> vector<4x256xf32>
    %408 = vector.broadcast %123 : vector<1x256xf32> to vector<4x256xf32>
    %409 = arith.mulf %407, %408 : vector<4x256xf32>
    %410 = vector.extract_strided_slice %356 {offsets = [0, 7], sizes = [4, 1], strides = [1, 1]} : vector<4x25xf32> to vector<4x1xf32>
    %411 = vector.broadcast %410 : vector<4x1xf32> to vector<4x256xf32>
    %412 = arith.mulf %409, %411 : vector<4x256xf32>
    %413 = arith.addf %406, %412 : vector<4x256xf32>
    %c15_i32_102 = arith.constant 15 : i32
    %414 = tpu.dynamic_rotate %355 by %c15_i32_102 dim 1 : vector<4x256xf32>, i32 -> vector<4x256xf32>
    %415 = vector.broadcast %136 : vector<1x256xf32> to vector<4x256xf32>
    %416 = arith.mulf %414, %415 : vector<4x256xf32>
    %417 = vector.extract_strided_slice %356 {offsets = [0, 8], sizes = [4, 1], strides = [1, 1]} : vector<4x25xf32> to vector<4x1xf32>
    %418 = vector.broadcast %417 : vector<4x1xf32> to vector<4x256xf32>
    %419 = arith.mulf %416, %418 : vector<4x256xf32>
    %420 = arith.addf %413, %419 : vector<4x256xf32>
    %c14_i32_103 = arith.constant 14 : i32
    %421 = tpu.dynamic_rotate %355 by %c14_i32_103 dim 1 : vector<4x256xf32>, i32 -> vector<4x256xf32>
    %422 = vector.broadcast %149 : vector<1x256xf32> to vector<4x256xf32>
    %423 = arith.mulf %421, %422 : vector<4x256xf32>
    %424 = vector.extract_strided_slice %356 {offsets = [0, 9], sizes = [4, 1], strides = [1, 1]} : vector<4x25xf32> to vector<4x1xf32>
    %425 = vector.broadcast %424 : vector<4x1xf32> to vector<4x256xf32>
    %426 = arith.mulf %423, %425 : vector<4x256xf32>
    %427 = arith.addf %420, %426 : vector<4x256xf32>
    %c2_i32_104 = arith.constant 2 : i32
    %428 = tpu.dynamic_rotate %355 by %c2_i32_104 dim 1 : vector<4x256xf32>, i32 -> vector<4x256xf32>
    %429 = vector.broadcast %162 : vector<1x256xf32> to vector<4x256xf32>
    %430 = arith.mulf %428, %429 : vector<4x256xf32>
    %431 = vector.extract_strided_slice %356 {offsets = [0, 10], sizes = [4, 1], strides = [1, 1]} : vector<4x25xf32> to vector<4x1xf32>
    %432 = vector.broadcast %431 : vector<4x1xf32> to vector<4x256xf32>
    %433 = arith.mulf %430, %432 : vector<4x256xf32>
    %434 = arith.addf %427, %433 : vector<4x256xf32>
    %c1_i32_105 = arith.constant 1 : i32
    %435 = tpu.dynamic_rotate %355 by %c1_i32_105 dim 1 : vector<4x256xf32>, i32 -> vector<4x256xf32>
    %436 = vector.broadcast %175 : vector<1x256xf32> to vector<4x256xf32>
    %437 = arith.mulf %435, %436 : vector<4x256xf32>
    %438 = vector.extract_strided_slice %356 {offsets = [0, 11], sizes = [4, 1], strides = [1, 1]} : vector<4x25xf32> to vector<4x1xf32>
    %439 = vector.broadcast %438 : vector<4x1xf32> to vector<4x256xf32>
    %440 = arith.mulf %437, %439 : vector<4x256xf32>
    %441 = arith.addf %434, %440 : vector<4x256xf32>
    %442 = vector.broadcast %188 : vector<1x256xf32> to vector<4x256xf32>
    %443 = arith.mulf %355, %442 : vector<4x256xf32>
    %444 = vector.extract_strided_slice %356 {offsets = [0, 12], sizes = [4, 1], strides = [1, 1]} : vector<4x25xf32> to vector<4x1xf32>
    %445 = vector.broadcast %444 : vector<4x1xf32> to vector<4x256xf32>
    %446 = arith.mulf %443, %445 : vector<4x256xf32>
    %447 = arith.addf %441, %446 : vector<4x256xf32>
    %c255_i32 = arith.constant 255 : i32
    %448 = tpu.dynamic_rotate %355 by %c255_i32 dim 1 : vector<4x256xf32>, i32 -> vector<4x256xf32>
    %449 = vector.broadcast %201 : vector<1x256xf32> to vector<4x256xf32>
    %450 = arith.mulf %448, %449 : vector<4x256xf32>
    %451 = vector.extract_strided_slice %356 {offsets = [0, 13], sizes = [4, 1], strides = [1, 1]} : vector<4x25xf32> to vector<4x1xf32>
    %452 = vector.broadcast %451 : vector<4x1xf32> to vector<4x256xf32>
    %453 = arith.mulf %450, %452 : vector<4x256xf32>
    %454 = arith.addf %447, %453 : vector<4x256xf32>
    %c254_i32 = arith.constant 254 : i32
    %455 = tpu.dynamic_rotate %355 by %c254_i32 dim 1 : vector<4x256xf32>, i32 -> vector<4x256xf32>
    %456 = vector.broadcast %214 : vector<1x256xf32> to vector<4x256xf32>
    %457 = arith.mulf %455, %456 : vector<4x256xf32>
    %458 = vector.extract_strided_slice %356 {offsets = [0, 14], sizes = [4, 1], strides = [1, 1]} : vector<4x25xf32> to vector<4x1xf32>
    %459 = vector.broadcast %458 : vector<4x1xf32> to vector<4x256xf32>
    %460 = arith.mulf %457, %459 : vector<4x256xf32>
    %461 = arith.addf %454, %460 : vector<4x256xf32>
    %c242_i32 = arith.constant 242 : i32
    %462 = tpu.dynamic_rotate %355 by %c242_i32 dim 1 : vector<4x256xf32>, i32 -> vector<4x256xf32>
    %463 = vector.broadcast %227 : vector<1x256xf32> to vector<4x256xf32>
    %464 = arith.mulf %462, %463 : vector<4x256xf32>
    %465 = vector.extract_strided_slice %356 {offsets = [0, 15], sizes = [4, 1], strides = [1, 1]} : vector<4x25xf32> to vector<4x1xf32>
    %466 = vector.broadcast %465 : vector<4x1xf32> to vector<4x256xf32>
    %467 = arith.mulf %464, %466 : vector<4x256xf32>
    %468 = arith.addf %461, %467 : vector<4x256xf32>
    %c241_i32 = arith.constant 241 : i32
    %469 = tpu.dynamic_rotate %355 by %c241_i32 dim 1 : vector<4x256xf32>, i32 -> vector<4x256xf32>
    %470 = vector.broadcast %240 : vector<1x256xf32> to vector<4x256xf32>
    %471 = arith.mulf %469, %470 : vector<4x256xf32>
    %472 = vector.extract_strided_slice %356 {offsets = [0, 16], sizes = [4, 1], strides = [1, 1]} : vector<4x25xf32> to vector<4x1xf32>
    %473 = vector.broadcast %472 : vector<4x1xf32> to vector<4x256xf32>
    %474 = arith.mulf %471, %473 : vector<4x256xf32>
    %475 = arith.addf %468, %474 : vector<4x256xf32>
    %c240_i32_106 = arith.constant 240 : i32
    %476 = tpu.dynamic_rotate %355 by %c240_i32_106 dim 1 : vector<4x256xf32>, i32 -> vector<4x256xf32>
    %477 = vector.broadcast %253 : vector<1x256xf32> to vector<4x256xf32>
    %478 = arith.mulf %476, %477 : vector<4x256xf32>
    %479 = vector.extract_strided_slice %356 {offsets = [0, 17], sizes = [4, 1], strides = [1, 1]} : vector<4x25xf32> to vector<4x1xf32>
    %480 = vector.broadcast %479 : vector<4x1xf32> to vector<4x256xf32>
    %481 = arith.mulf %478, %480 : vector<4x256xf32>
    %482 = arith.addf %475, %481 : vector<4x256xf32>
    %c239_i32 = arith.constant 239 : i32
    %483 = tpu.dynamic_rotate %355 by %c239_i32 dim 1 : vector<4x256xf32>, i32 -> vector<4x256xf32>
    %484 = vector.broadcast %266 : vector<1x256xf32> to vector<4x256xf32>
    %485 = arith.mulf %483, %484 : vector<4x256xf32>
    %486 = vector.extract_strided_slice %356 {offsets = [0, 18], sizes = [4, 1], strides = [1, 1]} : vector<4x25xf32> to vector<4x1xf32>
    %487 = vector.broadcast %486 : vector<4x1xf32> to vector<4x256xf32>
    %488 = arith.mulf %485, %487 : vector<4x256xf32>
    %489 = arith.addf %482, %488 : vector<4x256xf32>
    %c238_i32 = arith.constant 238 : i32
    %490 = tpu.dynamic_rotate %355 by %c238_i32 dim 1 : vector<4x256xf32>, i32 -> vector<4x256xf32>
    %491 = vector.broadcast %279 : vector<1x256xf32> to vector<4x256xf32>
    %492 = arith.mulf %490, %491 : vector<4x256xf32>
    %493 = vector.extract_strided_slice %356 {offsets = [0, 19], sizes = [4, 1], strides = [1, 1]} : vector<4x25xf32> to vector<4x1xf32>
    %494 = vector.broadcast %493 : vector<4x1xf32> to vector<4x256xf32>
    %495 = arith.mulf %492, %494 : vector<4x256xf32>
    %496 = arith.addf %489, %495 : vector<4x256xf32>
    %c226_i32 = arith.constant 226 : i32
    %497 = tpu.dynamic_rotate %355 by %c226_i32 dim 1 : vector<4x256xf32>, i32 -> vector<4x256xf32>
    %498 = vector.broadcast %292 : vector<1x256xf32> to vector<4x256xf32>
    %499 = arith.mulf %497, %498 : vector<4x256xf32>
    %500 = vector.extract_strided_slice %356 {offsets = [0, 20], sizes = [4, 1], strides = [1, 1]} : vector<4x25xf32> to vector<4x1xf32>
    %501 = vector.broadcast %500 : vector<4x1xf32> to vector<4x256xf32>
    %502 = arith.mulf %499, %501 : vector<4x256xf32>
    %503 = arith.addf %496, %502 : vector<4x256xf32>
    %c225_i32 = arith.constant 225 : i32
    %504 = tpu.dynamic_rotate %355 by %c225_i32 dim 1 : vector<4x256xf32>, i32 -> vector<4x256xf32>
    %505 = vector.broadcast %305 : vector<1x256xf32> to vector<4x256xf32>
    %506 = arith.mulf %504, %505 : vector<4x256xf32>
    %507 = vector.extract_strided_slice %356 {offsets = [0, 21], sizes = [4, 1], strides = [1, 1]} : vector<4x25xf32> to vector<4x1xf32>
    %508 = vector.broadcast %507 : vector<4x1xf32> to vector<4x256xf32>
    %509 = arith.mulf %506, %508 : vector<4x256xf32>
    %510 = arith.addf %503, %509 : vector<4x256xf32>
    %c224_i32_107 = arith.constant 224 : i32
    %511 = tpu.dynamic_rotate %355 by %c224_i32_107 dim 1 : vector<4x256xf32>, i32 -> vector<4x256xf32>
    %512 = vector.broadcast %318 : vector<1x256xf32> to vector<4x256xf32>
    %513 = arith.mulf %511, %512 : vector<4x256xf32>
    %514 = vector.extract_strided_slice %356 {offsets = [0, 22], sizes = [4, 1], strides = [1, 1]} : vector<4x25xf32> to vector<4x1xf32>
    %515 = vector.broadcast %514 : vector<4x1xf32> to vector<4x256xf32>
    %516 = arith.mulf %513, %515 : vector<4x256xf32>
    %517 = arith.addf %510, %516 : vector<4x256xf32>
    %c223_i32 = arith.constant 223 : i32
    %518 = tpu.dynamic_rotate %355 by %c223_i32 dim 1 : vector<4x256xf32>, i32 -> vector<4x256xf32>
    %519 = vector.broadcast %331 : vector<1x256xf32> to vector<4x256xf32>
    %520 = arith.mulf %518, %519 : vector<4x256xf32>
    %521 = vector.extract_strided_slice %356 {offsets = [0, 23], sizes = [4, 1], strides = [1, 1]} : vector<4x25xf32> to vector<4x1xf32>
    %522 = vector.broadcast %521 : vector<4x1xf32> to vector<4x256xf32>
    %523 = arith.mulf %520, %522 : vector<4x256xf32>
    %524 = arith.addf %517, %523 : vector<4x256xf32>
    %c222_i32 = arith.constant 222 : i32
    %525 = tpu.dynamic_rotate %355 by %c222_i32 dim 1 : vector<4x256xf32>, i32 -> vector<4x256xf32>
    %526 = vector.broadcast %344 : vector<1x256xf32> to vector<4x256xf32>
    %527 = arith.mulf %525, %526 : vector<4x256xf32>
    %528 = vector.extract_strided_slice %356 {offsets = [0, 24], sizes = [4, 1], strides = [1, 1]} : vector<4x25xf32> to vector<4x1xf32>
    %529 = vector.broadcast %528 : vector<4x1xf32> to vector<4x256xf32>
    %530 = arith.mulf %527, %529 : vector<4x256xf32>
    %531 = arith.addf %524, %530 : vector<4x256xf32>
    %c0_108 = arith.constant 0 : index
    %c1 = arith.constant 1 : index
    %532 = vector.load %arg7[%c0_108, %c1] : memref<8x4xf32, #tpu.memory_space<vmem>>, vector<4x1xf32>
    %533 = vector.broadcast %532 : vector<4x1xf32> to vector<4x256xf32>
    %534 = arith.addf %531, %533 : vector<4x256xf32>
    %535 = arith.negf %534 : vector<4x256xf32>
    %536 = math.exp %535 : vector<4x256xf32>
    %cst_109 = arith.constant 1.000000e+00 : f32
    %537 = vector.broadcast %cst_109 : f32 to vector<4x256xf32>
    %538 = arith.addf %537, %536 : vector<4x256xf32>
    %539 = arith.divf %537, %538 : vector<4x256xf32>
    %540 = arith.mulf %534, %539 : vector<4x256xf32>
    %c0_110 = arith.constant 0 : index
    %c0_111 = arith.constant 0 : index
    %541 = vector.load %arg3[%c0_110, %c0_111] : memref<8x4xf32, #tpu.memory_space<vmem>>, vector<8x4xf32>
    %cst_112 = arith.constant dense<0.000000e+00> : vector<8x256xf32>
    %542 = tpu.matmul %541, %355, %cst_112 {dimension_numbers = #tpu.dot_dimension_numbers<[1], [0], [0], [1], [0, 0, 1, 1], [], []>} : vector<8x4xf32>, vector<4x256xf32>, vector<8x256xf32> -> vector<8x256xf32>
    %c0_113 = arith.constant 0 : index
    %c0_114 = arith.constant 0 : index
    %543 = vector.load %arg4[%c0_113, %c0_114] : memref<8x4xf32, #tpu.memory_space<vmem>>, vector<8x4xf32>
    %cst_115 = arith.constant dense<0.000000e+00> : vector<8x256xf32>
    %544 = tpu.matmul %543, %540, %cst_115 {dimension_numbers = #tpu.dot_dimension_numbers<[1], [0], [0], [1], [0, 0, 1, 1], [], []>} : vector<8x4xf32>, vector<4x256xf32>, vector<8x256xf32> -> vector<8x256xf32>
    %545 = arith.addf %542, %544 : vector<8x256xf32>
    %c0_116 = arith.constant 0 : index
    %c2 = arith.constant 2 : index
    %546 = vector.load %arg7[%c0_116, %c2] : memref<8x4xf32, #tpu.memory_space<vmem>>, vector<8x1xf32>
    %547 = vector.broadcast %546 : vector<8x1xf32> to vector<8x256xf32>
    %548 = arith.addf %545, %547 : vector<8x256xf32>
    %c0_117 = arith.constant 0 : index
    %c0_118 = arith.constant 0 : index
    %549 = vector.load %arg6[%c0_117, %c0_118] : memref<8x25xf32, #tpu.memory_space<vmem>>, vector<8x25xf32>
    %cst_119 = arith.constant 0.000000e+00 : f32
    %550 = vector.broadcast %cst_119 : f32 to vector<8x256xf32>
    %c34_i32_120 = arith.constant 34 : i32
    %551 = tpu.dynamic_rotate %548 by %c34_i32_120 dim 1 : vector<8x256xf32>, i32 -> vector<8x256xf32>
    %552 = vector.broadcast %32 : vector<1x256xf32> to vector<8x256xf32>
    %553 = arith.mulf %551, %552 : vector<8x256xf32>
    %554 = vector.extract_strided_slice %549 {offsets = [0, 0], sizes = [8, 1], strides = [1, 1]} : vector<8x25xf32> to vector<8x1xf32>
    %555 = vector.broadcast %554 : vector<8x1xf32> to vector<8x256xf32>
    %556 = arith.mulf %553, %555 : vector<8x256xf32>
    %557 = arith.addf %550, %556 : vector<8x256xf32>
    %c33_i32_121 = arith.constant 33 : i32
    %558 = tpu.dynamic_rotate %548 by %c33_i32_121 dim 1 : vector<8x256xf32>, i32 -> vector<8x256xf32>
    %559 = vector.broadcast %45 : vector<1x256xf32> to vector<8x256xf32>
    %560 = arith.mulf %558, %559 : vector<8x256xf32>
    %561 = vector.extract_strided_slice %549 {offsets = [0, 1], sizes = [8, 1], strides = [1, 1]} : vector<8x25xf32> to vector<8x1xf32>
    %562 = vector.broadcast %561 : vector<8x1xf32> to vector<8x256xf32>
    %563 = arith.mulf %560, %562 : vector<8x256xf32>
    %564 = arith.addf %557, %563 : vector<8x256xf32>
    %c32_i32_122 = arith.constant 32 : i32
    %565 = tpu.dynamic_rotate %548 by %c32_i32_122 dim 1 : vector<8x256xf32>, i32 -> vector<8x256xf32>
    %566 = vector.broadcast %58 : vector<1x256xf32> to vector<8x256xf32>
    %567 = arith.mulf %565, %566 : vector<8x256xf32>
    %568 = vector.extract_strided_slice %549 {offsets = [0, 2], sizes = [8, 1], strides = [1, 1]} : vector<8x25xf32> to vector<8x1xf32>
    %569 = vector.broadcast %568 : vector<8x1xf32> to vector<8x256xf32>
    %570 = arith.mulf %567, %569 : vector<8x256xf32>
    %571 = arith.addf %564, %570 : vector<8x256xf32>
    %c31_i32_123 = arith.constant 31 : i32
    %572 = tpu.dynamic_rotate %548 by %c31_i32_123 dim 1 : vector<8x256xf32>, i32 -> vector<8x256xf32>
    %573 = vector.broadcast %71 : vector<1x256xf32> to vector<8x256xf32>
    %574 = arith.mulf %572, %573 : vector<8x256xf32>
    %575 = vector.extract_strided_slice %549 {offsets = [0, 3], sizes = [8, 1], strides = [1, 1]} : vector<8x25xf32> to vector<8x1xf32>
    %576 = vector.broadcast %575 : vector<8x1xf32> to vector<8x256xf32>
    %577 = arith.mulf %574, %576 : vector<8x256xf32>
    %578 = arith.addf %571, %577 : vector<8x256xf32>
    %c30_i32_124 = arith.constant 30 : i32
    %579 = tpu.dynamic_rotate %548 by %c30_i32_124 dim 1 : vector<8x256xf32>, i32 -> vector<8x256xf32>
    %580 = vector.broadcast %84 : vector<1x256xf32> to vector<8x256xf32>
    %581 = arith.mulf %579, %580 : vector<8x256xf32>
    %582 = vector.extract_strided_slice %549 {offsets = [0, 4], sizes = [8, 1], strides = [1, 1]} : vector<8x25xf32> to vector<8x1xf32>
    %583 = vector.broadcast %582 : vector<8x1xf32> to vector<8x256xf32>
    %584 = arith.mulf %581, %583 : vector<8x256xf32>
    %585 = arith.addf %578, %584 : vector<8x256xf32>
    %c18_i32_125 = arith.constant 18 : i32
    %586 = tpu.dynamic_rotate %548 by %c18_i32_125 dim 1 : vector<8x256xf32>, i32 -> vector<8x256xf32>
    %587 = vector.broadcast %97 : vector<1x256xf32> to vector<8x256xf32>
    %588 = arith.mulf %586, %587 : vector<8x256xf32>
    %589 = vector.extract_strided_slice %549 {offsets = [0, 5], sizes = [8, 1], strides = [1, 1]} : vector<8x25xf32> to vector<8x1xf32>
    %590 = vector.broadcast %589 : vector<8x1xf32> to vector<8x256xf32>
    %591 = arith.mulf %588, %590 : vector<8x256xf32>
    %592 = arith.addf %585, %591 : vector<8x256xf32>
    %c17_i32_126 = arith.constant 17 : i32
    %593 = tpu.dynamic_rotate %548 by %c17_i32_126 dim 1 : vector<8x256xf32>, i32 -> vector<8x256xf32>
    %594 = vector.broadcast %110 : vector<1x256xf32> to vector<8x256xf32>
    %595 = arith.mulf %593, %594 : vector<8x256xf32>
    %596 = vector.extract_strided_slice %549 {offsets = [0, 6], sizes = [8, 1], strides = [1, 1]} : vector<8x25xf32> to vector<8x1xf32>
    %597 = vector.broadcast %596 : vector<8x1xf32> to vector<8x256xf32>
    %598 = arith.mulf %595, %597 : vector<8x256xf32>
    %599 = arith.addf %592, %598 : vector<8x256xf32>
    %c16_i32_127 = arith.constant 16 : i32
    %600 = tpu.dynamic_rotate %548 by %c16_i32_127 dim 1 : vector<8x256xf32>, i32 -> vector<8x256xf32>
    %601 = vector.broadcast %123 : vector<1x256xf32> to vector<8x256xf32>
    %602 = arith.mulf %600, %601 : vector<8x256xf32>
    %603 = vector.extract_strided_slice %549 {offsets = [0, 7], sizes = [8, 1], strides = [1, 1]} : vector<8x25xf32> to vector<8x1xf32>
    %604 = vector.broadcast %603 : vector<8x1xf32> to vector<8x256xf32>
    %605 = arith.mulf %602, %604 : vector<8x256xf32>
    %606 = arith.addf %599, %605 : vector<8x256xf32>
    %c15_i32_128 = arith.constant 15 : i32
    %607 = tpu.dynamic_rotate %548 by %c15_i32_128 dim 1 : vector<8x256xf32>, i32 -> vector<8x256xf32>
    %608 = vector.broadcast %136 : vector<1x256xf32> to vector<8x256xf32>
    %609 = arith.mulf %607, %608 : vector<8x256xf32>
    %610 = vector.extract_strided_slice %549 {offsets = [0, 8], sizes = [8, 1], strides = [1, 1]} : vector<8x25xf32> to vector<8x1xf32>
    %611 = vector.broadcast %610 : vector<8x1xf32> to vector<8x256xf32>
    %612 = arith.mulf %609, %611 : vector<8x256xf32>
    %613 = arith.addf %606, %612 : vector<8x256xf32>
    %c14_i32_129 = arith.constant 14 : i32
    %614 = tpu.dynamic_rotate %548 by %c14_i32_129 dim 1 : vector<8x256xf32>, i32 -> vector<8x256xf32>
    %615 = vector.broadcast %149 : vector<1x256xf32> to vector<8x256xf32>
    %616 = arith.mulf %614, %615 : vector<8x256xf32>
    %617 = vector.extract_strided_slice %549 {offsets = [0, 9], sizes = [8, 1], strides = [1, 1]} : vector<8x25xf32> to vector<8x1xf32>
    %618 = vector.broadcast %617 : vector<8x1xf32> to vector<8x256xf32>
    %619 = arith.mulf %616, %618 : vector<8x256xf32>
    %620 = arith.addf %613, %619 : vector<8x256xf32>
    %c2_i32_130 = arith.constant 2 : i32
    %621 = tpu.dynamic_rotate %548 by %c2_i32_130 dim 1 : vector<8x256xf32>, i32 -> vector<8x256xf32>
    %622 = vector.broadcast %162 : vector<1x256xf32> to vector<8x256xf32>
    %623 = arith.mulf %621, %622 : vector<8x256xf32>
    %624 = vector.extract_strided_slice %549 {offsets = [0, 10], sizes = [8, 1], strides = [1, 1]} : vector<8x25xf32> to vector<8x1xf32>
    %625 = vector.broadcast %624 : vector<8x1xf32> to vector<8x256xf32>
    %626 = arith.mulf %623, %625 : vector<8x256xf32>
    %627 = arith.addf %620, %626 : vector<8x256xf32>
    %c1_i32_131 = arith.constant 1 : i32
    %628 = tpu.dynamic_rotate %548 by %c1_i32_131 dim 1 : vector<8x256xf32>, i32 -> vector<8x256xf32>
    %629 = vector.broadcast %175 : vector<1x256xf32> to vector<8x256xf32>
    %630 = arith.mulf %628, %629 : vector<8x256xf32>
    %631 = vector.extract_strided_slice %549 {offsets = [0, 11], sizes = [8, 1], strides = [1, 1]} : vector<8x25xf32> to vector<8x1xf32>
    %632 = vector.broadcast %631 : vector<8x1xf32> to vector<8x256xf32>
    %633 = arith.mulf %630, %632 : vector<8x256xf32>
    %634 = arith.addf %627, %633 : vector<8x256xf32>
    %635 = vector.broadcast %188 : vector<1x256xf32> to vector<8x256xf32>
    %636 = arith.mulf %548, %635 : vector<8x256xf32>
    %637 = vector.extract_strided_slice %549 {offsets = [0, 12], sizes = [8, 1], strides = [1, 1]} : vector<8x25xf32> to vector<8x1xf32>
    %638 = vector.broadcast %637 : vector<8x1xf32> to vector<8x256xf32>
    %639 = arith.mulf %636, %638 : vector<8x256xf32>
    %640 = arith.addf %634, %639 : vector<8x256xf32>
    %c255_i32_132 = arith.constant 255 : i32
    %641 = tpu.dynamic_rotate %548 by %c255_i32_132 dim 1 : vector<8x256xf32>, i32 -> vector<8x256xf32>
    %642 = vector.broadcast %201 : vector<1x256xf32> to vector<8x256xf32>
    %643 = arith.mulf %641, %642 : vector<8x256xf32>
    %644 = vector.extract_strided_slice %549 {offsets = [0, 13], sizes = [8, 1], strides = [1, 1]} : vector<8x25xf32> to vector<8x1xf32>
    %645 = vector.broadcast %644 : vector<8x1xf32> to vector<8x256xf32>
    %646 = arith.mulf %643, %645 : vector<8x256xf32>
    %647 = arith.addf %640, %646 : vector<8x256xf32>
    %c254_i32_133 = arith.constant 254 : i32
    %648 = tpu.dynamic_rotate %548 by %c254_i32_133 dim 1 : vector<8x256xf32>, i32 -> vector<8x256xf32>
    %649 = vector.broadcast %214 : vector<1x256xf32> to vector<8x256xf32>
    %650 = arith.mulf %648, %649 : vector<8x256xf32>
    %651 = vector.extract_strided_slice %549 {offsets = [0, 14], sizes = [8, 1], strides = [1, 1]} : vector<8x25xf32> to vector<8x1xf32>
    %652 = vector.broadcast %651 : vector<8x1xf32> to vector<8x256xf32>
    %653 = arith.mulf %650, %652 : vector<8x256xf32>
    %654 = arith.addf %647, %653 : vector<8x256xf32>
    %c242_i32_134 = arith.constant 242 : i32
    %655 = tpu.dynamic_rotate %548 by %c242_i32_134 dim 1 : vector<8x256xf32>, i32 -> vector<8x256xf32>
    %656 = vector.broadcast %227 : vector<1x256xf32> to vector<8x256xf32>
    %657 = arith.mulf %655, %656 : vector<8x256xf32>
    %658 = vector.extract_strided_slice %549 {offsets = [0, 15], sizes = [8, 1], strides = [1, 1]} : vector<8x25xf32> to vector<8x1xf32>
    %659 = vector.broadcast %658 : vector<8x1xf32> to vector<8x256xf32>
    %660 = arith.mulf %657, %659 : vector<8x256xf32>
    %661 = arith.addf %654, %660 : vector<8x256xf32>
    %c241_i32_135 = arith.constant 241 : i32
    %662 = tpu.dynamic_rotate %548 by %c241_i32_135 dim 1 : vector<8x256xf32>, i32 -> vector<8x256xf32>
    %663 = vector.broadcast %240 : vector<1x256xf32> to vector<8x256xf32>
    %664 = arith.mulf %662, %663 : vector<8x256xf32>
    %665 = vector.extract_strided_slice %549 {offsets = [0, 16], sizes = [8, 1], strides = [1, 1]} : vector<8x25xf32> to vector<8x1xf32>
    %666 = vector.broadcast %665 : vector<8x1xf32> to vector<8x256xf32>
    %667 = arith.mulf %664, %666 : vector<8x256xf32>
    %668 = arith.addf %661, %667 : vector<8x256xf32>
    %c240_i32_136 = arith.constant 240 : i32
    %669 = tpu.dynamic_rotate %548 by %c240_i32_136 dim 1 : vector<8x256xf32>, i32 -> vector<8x256xf32>
    %670 = vector.broadcast %253 : vector<1x256xf32> to vector<8x256xf32>
    %671 = arith.mulf %669, %670 : vector<8x256xf32>
    %672 = vector.extract_strided_slice %549 {offsets = [0, 17], sizes = [8, 1], strides = [1, 1]} : vector<8x25xf32> to vector<8x1xf32>
    %673 = vector.broadcast %672 : vector<8x1xf32> to vector<8x256xf32>
    %674 = arith.mulf %671, %673 : vector<8x256xf32>
    %675 = arith.addf %668, %674 : vector<8x256xf32>
    %c239_i32_137 = arith.constant 239 : i32
    %676 = tpu.dynamic_rotate %548 by %c239_i32_137 dim 1 : vector<8x256xf32>, i32 -> vector<8x256xf32>
    %677 = vector.broadcast %266 : vector<1x256xf32> to vector<8x256xf32>
    %678 = arith.mulf %676, %677 : vector<8x256xf32>
    %679 = vector.extract_strided_slice %549 {offsets = [0, 18], sizes = [8, 1], strides = [1, 1]} : vector<8x25xf32> to vector<8x1xf32>
    %680 = vector.broadcast %679 : vector<8x1xf32> to vector<8x256xf32>
    %681 = arith.mulf %678, %680 : vector<8x256xf32>
    %682 = arith.addf %675, %681 : vector<8x256xf32>
    %c238_i32_138 = arith.constant 238 : i32
    %683 = tpu.dynamic_rotate %548 by %c238_i32_138 dim 1 : vector<8x256xf32>, i32 -> vector<8x256xf32>
    %684 = vector.broadcast %279 : vector<1x256xf32> to vector<8x256xf32>
    %685 = arith.mulf %683, %684 : vector<8x256xf32>
    %686 = vector.extract_strided_slice %549 {offsets = [0, 19], sizes = [8, 1], strides = [1, 1]} : vector<8x25xf32> to vector<8x1xf32>
    %687 = vector.broadcast %686 : vector<8x1xf32> to vector<8x256xf32>
    %688 = arith.mulf %685, %687 : vector<8x256xf32>
    %689 = arith.addf %682, %688 : vector<8x256xf32>
    %c226_i32_139 = arith.constant 226 : i32
    %690 = tpu.dynamic_rotate %548 by %c226_i32_139 dim 1 : vector<8x256xf32>, i32 -> vector<8x256xf32>
    %691 = vector.broadcast %292 : vector<1x256xf32> to vector<8x256xf32>
    %692 = arith.mulf %690, %691 : vector<8x256xf32>
    %693 = vector.extract_strided_slice %549 {offsets = [0, 20], sizes = [8, 1], strides = [1, 1]} : vector<8x25xf32> to vector<8x1xf32>
    %694 = vector.broadcast %693 : vector<8x1xf32> to vector<8x256xf32>
    %695 = arith.mulf %692, %694 : vector<8x256xf32>
    %696 = arith.addf %689, %695 : vector<8x256xf32>
    %c225_i32_140 = arith.constant 225 : i32
    %697 = tpu.dynamic_rotate %548 by %c225_i32_140 dim 1 : vector<8x256xf32>, i32 -> vector<8x256xf32>
    %698 = vector.broadcast %305 : vector<1x256xf32> to vector<8x256xf32>
    %699 = arith.mulf %697, %698 : vector<8x256xf32>
    %700 = vector.extract_strided_slice %549 {offsets = [0, 21], sizes = [8, 1], strides = [1, 1]} : vector<8x25xf32> to vector<8x1xf32>
    %701 = vector.broadcast %700 : vector<8x1xf32> to vector<8x256xf32>
    %702 = arith.mulf %699, %701 : vector<8x256xf32>
    %703 = arith.addf %696, %702 : vector<8x256xf32>
    %c224_i32_141 = arith.constant 224 : i32
    %704 = tpu.dynamic_rotate %548 by %c224_i32_141 dim 1 : vector<8x256xf32>, i32 -> vector<8x256xf32>
    %705 = vector.broadcast %318 : vector<1x256xf32> to vector<8x256xf32>
    %706 = arith.mulf %704, %705 : vector<8x256xf32>
    %707 = vector.extract_strided_slice %549 {offsets = [0, 22], sizes = [8, 1], strides = [1, 1]} : vector<8x25xf32> to vector<8x1xf32>
    %708 = vector.broadcast %707 : vector<8x1xf32> to vector<8x256xf32>
    %709 = arith.mulf %706, %708 : vector<8x256xf32>
    %710 = arith.addf %703, %709 : vector<8x256xf32>
    %c223_i32_142 = arith.constant 223 : i32
    %711 = tpu.dynamic_rotate %548 by %c223_i32_142 dim 1 : vector<8x256xf32>, i32 -> vector<8x256xf32>
    %712 = vector.broadcast %331 : vector<1x256xf32> to vector<8x256xf32>
    %713 = arith.mulf %711, %712 : vector<8x256xf32>
    %714 = vector.extract_strided_slice %549 {offsets = [0, 23], sizes = [8, 1], strides = [1, 1]} : vector<8x25xf32> to vector<8x1xf32>
    %715 = vector.broadcast %714 : vector<8x1xf32> to vector<8x256xf32>
    %716 = arith.mulf %713, %715 : vector<8x256xf32>
    %717 = arith.addf %710, %716 : vector<8x256xf32>
    %c222_i32_143 = arith.constant 222 : i32
    %718 = tpu.dynamic_rotate %548 by %c222_i32_143 dim 1 : vector<8x256xf32>, i32 -> vector<8x256xf32>
    %719 = vector.broadcast %344 : vector<1x256xf32> to vector<8x256xf32>
    %720 = arith.mulf %718, %719 : vector<8x256xf32>
    %721 = vector.extract_strided_slice %549 {offsets = [0, 24], sizes = [8, 1], strides = [1, 1]} : vector<8x25xf32> to vector<8x1xf32>
    %722 = vector.broadcast %721 : vector<8x1xf32> to vector<8x256xf32>
    %723 = arith.mulf %720, %722 : vector<8x256xf32>
    %724 = arith.addf %717, %723 : vector<8x256xf32>
    %c0_144 = arith.constant 0 : index
    %c3 = arith.constant 3 : index
    %725 = vector.load %arg7[%c0_144, %c3] : memref<8x4xf32, #tpu.memory_space<vmem>>, vector<8x1xf32>
    %726 = vector.broadcast %725 : vector<8x1xf32> to vector<8x256xf32>
    %727 = arith.addf %724, %726 : vector<8x256xf32>
    %728 = vector.extract_strided_slice %2 {offsets = [0, 0], sizes = [8, 256], strides = [1, 1]} : vector<16x256xf32> to vector<8x256xf32>
    %729 = arith.addf %548, %728 : vector<8x256xf32>
    %730 = vector.extract_strided_slice %2 {offsets = [8, 0], sizes = [8, 256], strides = [1, 1]} : vector<16x256xf32> to vector<8x256xf32>
    %731 = arith.addf %727, %730 : vector<8x256xf32>
    %732 = tpu.concatenate %729, %731 in 0 : vector<8x256xf32>, vector<8x256xf32> -> vector<16x256xf32>
    %733 = arith.truncf %732 : vector<16x256xf32> to vector<16x256xbf16>
    %c0_145 = arith.constant 0 : index
    %c0_146 = arith.constant 0 : index
    %c0_147 = arith.constant 0 : index
    %734 = vector.load %arg8[%c0_145, %c0_146, %c0_147] : memref<1x16x256xbf16, #tpu.memory_space<vmem>>, vector<1x16x256xbf16>
    %735 = vector.shape_cast %734 : vector<1x16x256xbf16> to vector<16x256xbf16>
    %736 = vector.shape_cast %733 : vector<16x256xbf16> to vector<1x16x256xbf16>
    tpu.vector_store %arg8[%c0_145, %c0_146, %c0_147], %736 {strides = array<i32>} : memref<1x16x256xbf16, #tpu.memory_space<vmem>>, vector<1x16x256xbf16>,
    return
  }
  func.func @transform_0(%arg0: i32) -> (i32, i32, i32) {
    %c0_i32 = arith.constant 0 : i32
    %c0_i32_0 = arith.constant 0 : i32
    %c0_i32_1 = arith.constant 0 : i32
    return %arg0, %c0_i32, %c0_i32_0 : i32, i32, i32
  }
  func.func @transform_1(%arg0: i32) -> (i32, i32) {
    %c0_i32 = arith.constant 0 : i32
    %c0_i32_0 = arith.constant 0 : i32
    %c0_i32_1 = arith.constant 0 : i32
    return %c0_i32, %c0_i32_0 : i32, i32
  }
  func.func @transform_2(%arg0: i32) -> (i32, i32) {
    %c0_i32 = arith.constant 0 : i32
    %c0_i32_0 = arith.constant 0 : i32
    %c0_i32_1 = arith.constant 0 : i32
    return %c0_i32, %c0_i32_0 : i32, i32
  }
  func.func @transform_3(%arg0: i32) -> (i32, i32) {
    %c0_i32 = arith.constant 0 : i32
    %c0_i32_0 = arith.constant 0 : i32
    %c0_i32_1 = arith.constant 0 : i32
    return %c0_i32, %c0_i32_0 : i32, i32
  }
  func.func @transform_4(%arg0: i32) -> (i32, i32) {
    %c0_i32 = arith.constant 0 : i32
    %c0_i32_0 = arith.constant 0 : i32
    %c0_i32_1 = arith.constant 0 : i32
    return %c0_i32, %c0_i32_0 : i32, i32
  }
  func.func @transform_5(%arg0: i32) -> (i32, i32) {
    %c0_i32 = arith.constant 0 : i32
    %c0_i32_0 = arith.constant 0 : i32
    %c0_i32_1 = arith.constant 0 : i32
    return %c0_i32, %c0_i32_0 : i32, i32
  }
  func.func @transform_6(%arg0: i32) -> (i32, i32) {
    %c0_i32 = arith.constant 0 : i32
    %c0_i32_0 = arith.constant 0 : i32
    %c0_i32_1 = arith.constant 0 : i32
    return %c0_i32, %c0_i32_0 : i32, i32
  }
  func.func @transform_7(%arg0: i32) -> (i32, i32, i32) {
    %c0_i32 = arith.constant 0 : i32
    %c0_i32_0 = arith.constant 0 : i32
    %c0_i32_1 = arith.constant 0 : i32
    return %arg0, %c0_i32, %c0_i32_0 : i32, i32, i32
  }
}

</mosaic_0001>

<llo_original>
// kernel: tpu_custom_call.1
$region0: #{tpu_custom_call.1}
  #allocation0 [shape = 'u32[]', space=smem, size = 0x4, offset = 0x4, fixed_abs, tag = 'smem constant byte address 0x4 - core index']
  #allocation1 [shape = 'u32[144,128]{1,0:T(1,128)}', space=vmem, size = 0x12000, scoped, tag = 'internal scratch']
  %s0 = inlined_call_operand.vmem [shape: bf16[2,16,256], index: 0, kind: input, shape index: {}]
  %s1 = inlined_call_operand.hbm [shape: f32[4,16], index: 1, kind: input, shape index: {}]
  %s2 = inlined_call_operand.vmem [shape: f32[8,4], index: 2, kind: input, shape index: {}]
  %s3 = inlined_call_operand.vmem [shape: f32[8,4], index: 3, kind: input, shape index: {}]
  %s4 = inlined_call_operand.hbm [shape: f32[4,25], index: 4, kind: input, shape index: {}]
  %s5 = inlined_call_operand.vmem [shape: f32[8,25], index: 5, kind: input, shape index: {}]
  %s6 = inlined_call_operand.vmem [shape: f32[8,4], index: 6, kind: input, shape index: {}]
  %s7 = inlined_call_operand.hbm [shape: bf16[2,16,256], index: 7, kind: output, shape index: {}]
  %s8 = sld [smem:[#allocation0]]
  $region69: #{tpu_custom_call.1} parent=0
    _
  %s10 = ssub.s32 1, %s8
  %s11 = scalar_select 0, %s10, %s8
  $region1: #{tpu_custom_call.1} parent=0
    #allocation2 [shape = 'u8[2048]{0}', space=vmem, size = 0x800, scoped, tag = 'input window, operand 1, single buffered']
    #allocation3 [shape = 's32[2]{0}', space=sflag, size = 0x8, scoped, tag = 'scoped memory for tpu_custom_call.1']
    #allocation4 [shape = 's32[2]{0}', space=sflag, size = 0x8, scoped, tag = 'scoped memory for tpu_custom_call.1']
    #allocation5 [shape = 'u8[2048]{0}', space=vmem, size = 0x800, scoped, tag = 'input window, operand 4, single buffered']
    #allocation6 [shape = 's32[1]{0}', space=sflag, size = 0x4, scoped, tag = 'scoped memory for tpu_custom_call.1']
    #allocation7 [shape = 'u8[16384]{0}', space=vmem, size = 0x4000, scoped, tag = 'output window, operand 0']
    %12 = vsyncpa [#allocation3], 0
    %13 = vsyncpa [#allocation6], 0
    %14 = vsyncpa [#allocation4], 0
    %s15 = scalar_lea.sflag [#allocation4], 1
    %16 = vsyncpa %s15, 0
    loop: start=0, step=1, limit=4
    $region2: #{tpu_custom_call.1} parent=1 // loop_pre_header
      _
    $region3: #{tpu_custom_call.1} parent=1 // loop_header
      %s18 = sphi 0, %s22
      %p19 = scmp.ge.s32.totalorder %s18, 4
      %s28 = sphi 0, %s30
      %s31 = sphi 0, %s28
      %s32 = sphi 0, %s31
      %s48 = sphi 0, %s32
      %s52 = sphi 0, %s52
      %s54 = sphi 0, %s52
      %s55 = sphi 0, %s54
      %s69 = sphi 0, %s55
      %s73 = sphi 0, %s73
      %s75 = sphi 0, %s73
      %s76 = sphi 0, %s75
      %s90 = sphi 0, %s76
      %s94 = sphi 0, %s94
      %s96 = sphi 0, %s94
      %s97 = sphi 0, %s96
      %s111 = sphi 0, %s97
      %s115 = sphi 0, %s115
      %s117 = sphi 0, %s115
      %s118 = sphi 0, %s117
      %s132 = sphi 0, %s118
      %s136 = sphi 0, %s136
      %s138 = sphi 0, %s136
      %s139 = sphi 0, %s138
      %s153 = sphi 0, %s139
      %s157 = sphi 0, %s157
      %s159 = sphi 0, %s157
      %s160 = sphi 0, %s159
      %s174 = sphi 0, %s160
      %s180 = sphi 0, %s182
      %s183 = sphi 0, %s180
      %s184 = sphi 0, %s183
      %s200 = sphi 0, %s184
    $region4: #{tpu_custom_call.1} parent=1 // loop_header_branch
      %21 = sbr.rel (%p19) target = $region8
    $region5: #{tpu_custom_call.1} parent=1 // loop_body
      %s23 = ssub.s32 %s18, 1
      %s24 = ssub.s32 %s18, 2
      %s25 = sadd.s32 %s18, 1
      %s26 = ssub.s32 %s18, %s25
      %p27 = scmp.eq.s32.totalorder %s26, 0
      %s29 = sadd.s32 %s28, 1
      %s30 = scalar_select %p27, %s28, %s29
      %p33 = pneg %p27
      %p34 = scmp.eq.s32.totalorder %s18, 1
      %p35 = por %p33, %p34
      %p36 = scmp.ne.s32.totalorder %s28, %s31
      %p37 = scmp.eq.s32.totalorder %s18, 0
      %p38 = por %p36, %p37
      %p39 = scmp.ne.s32.totalorder %s28, %s31
      %p40 = scmp.eq.s32.totalorder %s23, 1
      %p41 = por %p39, %p40
      %p42 = scmp.ne.s32.totalorder %s31, %s32
      %p43 = scmp.eq.s32.totalorder %s23, 0
      %p44 = por %p42, %p43
      %p45 = scmp.ne.s32.totalorder %s31, %s32
      %p46 = scmp.eq.s32.totalorder %s24, 1
      %p47 = por %p45, %p46
      %p49 = scmp.ne.s32.totalorder %s32, %s48
      %p50 = scmp.eq.s32.totalorder %s24, 0
      %p51 = por %p49, %p50
      %s53 = sadd.s32 %s52, 1
      %p56 = scmp.eq.s32.totalorder %s18, 1
      %p57 = scmp.ne.s32.totalorder %s52, %s54
      %p58 = scmp.eq.s32.totalorder %s18, 0
      %p59 = por %p57, %p58
      %p60 = scmp.ne.s32.totalorder %s52, %s54
      %p61 = scmp.eq.s32.totalorder %s23, 1
      %p62 = por %p60, %p61
      %p63 = scmp.ne.s32.totalorder %s54, %s55
      %p64 = scmp.eq.s32.totalorder %s23, 0
      %p65 = por %p63, %p64
      %p66 = scmp.ne.s32.totalorder %s54, %s55
      %p67 = scmp.eq.s32.totalorder %s24, 1
      %p68 = por %p66, %p67
      %p70 = scmp.ne.s32.totalorder %s55, %s69
      %p71 = scmp.eq.s32.totalorder %s24, 0
      %p72 = por %p70, %p71
      %s74 = sadd.s32 %s73, 1
      %p77 = scmp.eq.s32.totalorder %s18, 1
      %p78 = scmp.ne.s32.totalorder %s73, %s75
      %p79 = scmp.eq.s32.totalorder %s18, 0
      %p80 = por %p78, %p79
      %p81 = scmp.ne.s32.totalorder %s73, %s75
      %p82 = scmp.eq.s32.totalorder %s23, 1
      %p83 = por %p81, %p82
      %p84 = scmp.ne.s32.totalorder %s75, %s76
      %p85 = scmp.eq.s32.totalorder %s23, 0
      %p86 = por %p84, %p85
      %p87 = scmp.ne.s32.totalorder %s75, %s76
      %p88 = scmp.eq.s32.totalorder %s24, 1
      %p89 = por %p87, %p88
      %p91 = scmp.ne.s32.totalorder %s76, %s90
      %p92 = scmp.eq.s32.totalorder %s24, 0
      %p93 = por %p91, %p92
      %s95 = sadd.s32 %s94, 1
      %p98 = scmp.eq.s32.totalorder %s18, 1
      %p99 = scmp.ne.s32.totalorder %s94, %s96
      %p100 = scmp.eq.s32.totalorder %s18, 0
      %p101 = por %p99, %p100
      %p102 = scmp.ne.s32.totalorder %s94, %s96
      %p103 = scmp.eq.s32.totalorder %s23, 1
      %p104 = por %p102, %p103
      %p105 = scmp.ne.s32.totalorder %s96, %s97
      %p106 = scmp.eq.s32.totalorder %s23, 0
      %p107 = por %p105, %p106
      %p108 = scmp.ne.s32.totalorder %s96, %s97
      %p109 = scmp.eq.s32.totalorder %s24, 1
      %p110 = por %p108, %p109
      %p112 = scmp.ne.s32.totalorder %s97, %s111
      %p113 = scmp.eq.s32.totalorder %s24, 0
      %p114 = por %p112, %p113
      %s116 = sadd.s32 %s115, 1
      %p119 = scmp.eq.s32.totalorder %s18, 1
      %p120 = scmp.ne.s32.totalorder %s115, %s117
      %p121 = scmp.eq.s32.totalorder %s18, 0
      %p122 = por %p120, %p121
      %p123 = scmp.ne.s32.totalorder %s115, %s117
      %p124 = scmp.eq.s32.totalorder %s23, 1
      %p125 = por %p123, %p124
      %p126 = scmp.ne.s32.totalorder %s117, %s118
      %p127 = scmp.eq.s32.totalorder %s23, 0
      %p128 = por %p126, %p127
      %p129 = scmp.ne.s32.totalorder %s117, %s118
      %p130 = scmp.eq.s32.totalorder %s24, 1
      %p131 = por %p129, %p130
      %p133 = scmp.ne.s32.totalorder %s118, %s132
      %p134 = scmp.eq.s32.totalorder %s24, 0
      %p135 = por %p133, %p134
      %s137 = sadd.s32 %s136, 1
      %p140 = scmp.eq.s32.totalorder %s18, 1
      %p141 = scmp.ne.s32.totalorder %s136, %s138
      %p142 = scmp.eq.s32.totalorder %s18, 0
      %p143 = por %p141, %p142
      %p144 = scmp.ne.s32.totalorder %s136, %s138
      %p145 = scmp.eq.s32.totalorder %s23, 1
      %p146 = por %p144, %p145
      %p147 = scmp.ne.s32.totalorder %s138, %s139
      %p148 = scmp.eq.s32.totalorder %s23, 0
      %p149 = por %p147, %p148
      %p150 = scmp.ne.s32.totalorder %s138, %s139
      %p151 = scmp.eq.s32.totalorder %s24, 1
      %p152 = por %p150, %p151
      %p154 = scmp.ne.s32.totalorder %s139, %s153
      %p155 = scmp.eq.s32.totalorder %s24, 0
      %p156 = por %p154, %p155
      %s158 = sadd.s32 %s157, 1
      %p161 = scmp.eq.s32.totalorder %s18, 1
      %p162 = scmp.ne.s32.totalorder %s157, %s159
      %p163 = scmp.eq.s32.totalorder %s18, 0
      %p164 = por %p162, %p163
      %p165 = scmp.ne.s32.totalorder %s157, %s159
      %p166 = scmp.eq.s32.totalorder %s23, 1
      %p167 = por %p165, %p166
      %p168 = scmp.ne.s32.totalorder %s159, %s160
      %p169 = scmp.eq.s32.totalorder %s23, 0
      %p170 = por %p168, %p169
      %p171 = scmp.ne.s32.totalorder %s159, %s160
      %p172 = scmp.eq.s32.totalorder %s24, 1
      %p173 = por %p171, %p172
      %p175 = scmp.ne.s32.totalorder %s160, %s174
      %p176 = scmp.eq.s32.totalorder %s24, 0
      %p177 = por %p175, %p176
      %s178 = ssub.s32 %s18, %s25
      %p179 = scmp.eq.s32.totalorder %s178, 0
      %s181 = sadd.s32 %s180, 1
      %s182 = scalar_select %p179, %s180, %s181
      %p185 = pneg %p179
      %p186 = scmp.eq.s32.totalorder %s18, 1
      %p187 = por %p185, %p186
      %p188 = scmp.ne.s32.totalorder %s180, %s183
      %p189 = scmp.eq.s32.totalorder %s18, 0
      %p190 = por %p188, %p189
      %p191 = scmp.ne.s32.totalorder %s180, %s183
      %p192 = scmp.eq.s32.totalorder %s23, 1
      %p193 = por %p191, %p192
      %p194 = scmp.ne.s32.totalorder %s183, %s184
      %p195 = scmp.eq.s32.totalorder %s23, 0
      %p196 = por %p194, %p195
      %p197 = scmp.ne.s32.totalorder %s183, %s184
      %p198 = scmp.eq.s32.totalorder %s24, 1
      %p199 = por %p197, %p198
      %p201 = scmp.ne.s32.totalorder %s184, %s200
      %p202 = scmp.eq.s32.totalorder %s24, 0
      %p203 = por %p201, %p202
      %p204 = scmp.le.s32.totalorder 1, %s18
      %p205 = scmp.lt.s32.totalorder %s18, 3
      %p206 = pnand %p204, %p205
      %p207 = pneg %p206
      // Predicated region
      $region9: #{tpu_custom_call.1} parent=5 // pred_check
        _
      $region10: #{tpu_custom_call.1} parent=5 // pred_check_branch
        %209 = sbr.rel (%p206) target = $region12
      $region11: #{tpu_custom_call.1} parent=5 // pred_region
        %s210 = ssub.s32 %s18, 1
        // Predicated region
        $region13: #{tpu_custom_call.1} parent=11 // pred_check
          %p211 = pneg %p65
        $region14: #{tpu_custom_call.1} parent=11 // pred_check_branch
          %213 = sbr.rel (%p211) target = $region16
        $region15: #{tpu_custom_call.1} parent=11 // pred_region
          %s215 = ssub.s32 64, 64
          %216 = vsyncadd [#allocation3], %s215
          %s218 = sshll.u32 [#allocation2], 4
          %s219 = int_to_ptr.vmem [resolvable:$true] %s218
          %221 = dma.hbm_to_vmem [thread:$0]  %s1, 64, %s219, [#allocation3]
        $region16: #{tpu_custom_call.1} parent=11 // pred_fallthru
          _
        // Predicated region
        $region17: #{tpu_custom_call.1} parent=11 // pred_check
          %p222 = pneg %p86
        $region18: #{tpu_custom_call.1} parent=11 // pred_check_branch
          %224 = sbr.rel (%p222) target = $region20
        $region19: #{tpu_custom_call.1} parent=11 // pred_region
          _
        $region20: #{tpu_custom_call.1} parent=11 // pred_fallthru
          _
        // Predicated region
        $region21: #{tpu_custom_call.1} parent=11 // pred_check
          %p225 = pneg %p107
        $region22: #{tpu_custom_call.1} parent=11 // pred_check_branch
          %227 = sbr.rel (%p225) target = $region24
        $region23: #{tpu_custom_call.1} parent=11 // pred_region
          _
        $region24: #{tpu_custom_call.1} parent=11 // pred_fallthru
          _
        // Predicated region
        $region25: #{tpu_custom_call.1} parent=11 // pred_check
          %p228 = pneg %p128
        $region26: #{tpu_custom_call.1} parent=11 // pred_check_branch
          %230 = sbr.rel (%p228) target = $region28
        $region27: #{tpu_custom_call.1} parent=11 // pred_region
          %s232 = ssub.s32 64, 64
          %233 = vsyncadd [#allocation6], %s232
          %s235 = sshll.u32 [#allocation5], 4
          %s236 = int_to_ptr.vmem [resolvable:$true] %s235
          %238 = dma.hbm_to_vmem [thread:$0]  %s4, 64, %s236, [#allocation6]
        $region28: #{tpu_custom_call.1} parent=11 // pred_fallthru
          _
        // Predicated region
        $region29: #{tpu_custom_call.1} parent=11 // pred_check
          %p239 = pneg %p149
        $region30: #{tpu_custom_call.1} parent=11 // pred_check_branch
          %241 = sbr.rel (%p239) target = $region32
        $region31: #{tpu_custom_call.1} parent=11 // pred_region
          _
        $region32: #{tpu_custom_call.1} parent=11 // pred_fallthru
          _
        // Predicated region
        $region33: #{tpu_custom_call.1} parent=11 // pred_check
          %p242 = pneg %p170
        $region34: #{tpu_custom_call.1} parent=11 // pred_check_branch
          %244 = sbr.rel (%p242) target = $region36
        $region35: #{tpu_custom_call.1} parent=11 // pred_region
          _
        $region36: #{tpu_custom_call.1} parent=11 // pred_fallthru
          _
      $region12: #{tpu_custom_call.1} parent=5 // pred_fallthru
        _
      %p245 = scmp.lt.s32.totalorder %s18, 2
      // Predicated region
      $region37: #{tpu_custom_call.1} parent=5 // pred_check
        %p246 = pneg %p245
      $region38: #{tpu_custom_call.1} parent=5 // pred_check_branch
        %248 = sbr.rel (%p246) target = $region40
      $region39: #{tpu_custom_call.1} parent=5 // pred_region
        // Predicated region
        $region41: #{tpu_custom_call.1} parent=39 // pred_check
          %p249 = pneg %p38
        $region42: #{tpu_custom_call.1} parent=39 // pred_check_branch
          %251 = sbr.rel (%p249) target = $region44
        $region43: #{tpu_custom_call.1} parent=39 // pred_region
          %p252 = scmp.lt.s32.totalorder %s18, 1
          %s253 = scalar_select %p252, %s18, 1
          %s254 = smul.addr %s253, 4
          %s255 = smul.addr %s254, 4
          %s256 = scalar_lea.vmem %s0, %s255
        $region44: #{tpu_custom_call.1} parent=39 // pred_fallthru
          _
      $region40: #{tpu_custom_call.1} parent=5 // pred_fallthru
        _
      %p257 = scmp.le.s32.totalorder 1, %s18
      %p258 = scmp.lt.s32.totalorder %s18, 3
      %p259 = pnand %p257, %p258
      %p260 = pneg %p259
      // Predicated region
      $region45: #{tpu_custom_call.1} parent=5 // pred_check
        _
      $region46: #{tpu_custom_call.1} parent=5 // pred_check_branch
        %262 = sbr.rel (%p259) target = $region48
      $region47: #{tpu_custom_call.1} parent=5 // pred_region
        %s263 = ssub.s32 %s18, 1
        // Predicated region
        $region49: #{tpu_custom_call.1} parent=47 // pred_check
          %p264 = pneg %p65
        $region50: #{tpu_custom_call.1} parent=47 // pred_check_branch
          %266 = sbr.rel (%p264) target = $region52
        $region51: #{tpu_custom_call.1} parent=47 // pred_region
          %267 = dma.done [#allocation3], 64
        $region52: #{tpu_custom_call.1} parent=47 // pred_fallthru
          _
        // Predicated region
        $region53: #{tpu_custom_call.1} parent=47 // pred_check
          %p268 = pneg %p128
        $region54: #{tpu_custom_call.1} parent=47 // pred_check_branch
          %270 = sbr.rel (%p268) target = $region56
        $region55: #{tpu_custom_call.1} parent=47 // pred_region
          %271 = dma.done [#allocation6], 64
        $region56: #{tpu_custom_call.1} parent=47 // pred_fallthru
          _
        %p272 = scmp.lt.s32.totalorder %s23, 1
        %s273 = scalar_select %p272, %s23, 1
        %s274 = smul.addr %s273, 4
        %s275 = smul.addr %s274, 4
        %s276 = scalar_lea.vmem %s0, %s275
        %p277 = pneg %p44
        %p278 = pneg %p41
        %p279 = pneg %p65
        %p280 = pneg %p62
        %p281 = pneg %p86
        %p282 = pneg %p83
        %p283 = pneg %p107
        %p284 = pneg %p104
        %p285 = pneg %p128
        %p286 = pneg %p125
        %p287 = pneg %p149
        %p288 = pneg %p146
        %p289 = pneg %p170
        %p290 = pneg %p167
        %p291 = pneg %p196
        %p292 = pneg %p193
        %s293 = sand.u32 %s183, 1
        %s294 = scalar_lea.sflag [#allocation4], %s293
        %s295 = sand.u32 %s183, 1
        %s296 = smul.addr %s295, 16
        %s297 = scalar_lea.vmem [#allocation7], %s296
        %p298 = scmp.lt.s32.totalorder %s23, 1
        %s299 = scalar_select %p298, %s23, 1
        %s300 = smul.addr %s299, 4
        %s301 = smul.addr %s300, 4
        %s302 = scalar_lea.vmem %s0, %s301
        %v303 = vld [vmem:[%s302] sm:$0xff]
        %v304 = vld [vmem:[%s302 + $0x8] sm:$0xff]
        %v305 = vunpack.c.l.bf16 %v303
        %v306 = vunpack.c.h.bf16 %v303
        %v307 = vunpack.c.l.bf16 %v304
        %v308 = vunpack.c.h.bf16 %v304
        %v309 = vlaneseq
        %v310 = vand.u32 %v309, 127
        %v311 = vadd.s32 %v310, 128
        %vm312 = vcmp.lt.s32.totalorder %v310, 0
        %v313 = vsub.s32 0, %v310
        %v314 = vsel %vm312, %v313, %v310
        %v315 = vshrl.u32 %v314, 4
        %v316 = vand.u32 %v314, 15
        %v317 = vsub.s32 0, %v316
        %v318 = vsel %vm312, %v317, %v316
        %vm319 = vcmp.lt.s32.totalorder %v311, 0
        %v320 = vsub.s32 0, %v311
        %v321 = vsel %vm319, %v320, %v311
        %v322 = vshrl.u32 %v321, 4
        %v323 = vand.u32 %v321, 15
        %v324 = vsub.s32 0, %v323
        %v325 = vsel %vm319, %v324, %v323
        %vm326 = vcmp.ne.s32.totalorder %v318, 0
        %vm327 = vcmp.ne.s32.totalorder %v325, 0
        %vm328 = vcmp.lt.s32.totalorder %v318, 0
        %vm329 = vcmp.lt.s32.totalorder %v325, 0
        %vm330 = vmand %vm328, %vm326
        %vm331 = vmand %vm329, %vm327
        %v332 = vadd.s32 %v318, 16
        %v333 = vadd.s32 %v325, 16
        %v334 = vsel %vm330, %v332, %v318
        %v335 = vsel %vm331, %v333, %v325
        %vm336 = vcmp.ge.s32.totalorder %v310, 32
        %vm337 = vcmp.ge.s32.totalorder %v311, 32
        %vm338 = vcmp.lt.s32.totalorder %v310, 288
        %vm339 = vcmp.lt.s32.totalorder %v311, 288
        %vm340 = vmand %vm336, %vm338
        %vm341 = vmand %vm337, %vm339
        %vm342 = vcmp.ge.s32.totalorder %v334, 2
        %vm343 = vcmp.ge.s32.totalorder %v335, 2
        %vm344 = vmand %vm340, %vm342
        %vm345 = vmand %vm341, %vm343
        %vm346 = vcmp.lt.s32.totalorder %v334, 18
        %vm347 = vcmp.lt.s32.totalorder %v335, 18
        %vm348 = vmand %vm344, %vm346
        %vm349 = vmand %vm345, %vm347
        %v350 = vsel %vm348, 1, 0
        %v351 = vsel %vm349, 1, 0
        %v352 = vcvt.s32.f32 %v350
        %v353 = vcvt.s32.f32 %v351
        %vm354 = vcmp.ge.s32.totalorder %v334, 1
        %vm355 = vcmp.ge.s32.totalorder %v335, 1
        %vm356 = vmand %vm340, %vm354
        %vm357 = vmand %vm341, %vm355
        %vm358 = vcmp.lt.s32.totalorder %v334, 17
        %vm359 = vcmp.lt.s32.totalorder %v335, 17
        %vm360 = vmand %vm356, %vm358
        %vm361 = vmand %vm357, %vm359
        %v362 = vsel %vm360, 1, 0
        %v363 = vsel %vm361, 1, 0
        %v364 = vcvt.s32.f32 %v362
        %v365 = vcvt.s32.f32 %v363
        %vm366 = vcmp.ge.s32.totalorder %v334, 0
        %vm367 = vcmp.ge.s32.totalorder %v335, 0
        %vm368 = vmand %vm340, %vm366
        %vm369 = vmand %vm341, %vm367
        %vm370 = vcmp.lt.s32.totalorder %v334, 16
        %vm371 = vcmp.lt.s32.totalorder %v335, 16
        %vm372 = vmand %vm368, %vm370
        %vm373 = vmand %vm369, %vm371
        %v374 = vsel %vm372, 1, 0
        %v375 = vsel %vm373, 1, 0
        %v376 = vcvt.s32.f32 %v374
        %v377 = vcvt.s32.f32 %v375
        %vm378 = vcmp.ge.s32.totalorder %v334, 4294967295
        %vm379 = vcmp.ge.s32.totalorder %v335, 4294967295
        %vm380 = vmand %vm340, %vm378
        %vm381 = vmand %vm341, %vm379
        %vm382 = vcmp.lt.s32.totalorder %v334, 15
        %vm383 = vcmp.lt.s32.totalorder %v335, 15
        %vm384 = vmand %vm380, %vm382
        %vm385 = vmand %vm381, %vm383
        %v386 = vsel %vm384, 1, 0
        %v387 = vsel %vm385, 1, 0
        %v388 = vcvt.s32.f32 %v386
        %v389 = vcvt.s32.f32 %v387
        %vm390 = vcmp.ge.s32.totalorder %v334, 4294967294
        %vm391 = vcmp.ge.s32.totalorder %v335, 4294967294
        %vm392 = vmand %vm340, %vm390
        %vm393 = vmand %vm341, %vm391
        %vm394 = vcmp.lt.s32.totalorder %v334, 14
        %vm395 = vcmp.lt.s32.totalorder %v335, 14
        %vm396 = vmand %vm392, %vm394
        %vm397 = vmand %vm393, %vm395
        %v398 = vsel %vm396, 1, 0
        %v399 = vsel %vm397, 1, 0
        %v400 = vcvt.s32.f32 %v398
        %v401 = vcvt.s32.f32 %v399
        %vm402 = vcmp.ge.s32.totalorder %v310, 16
        %vm403 = vcmp.ge.s32.totalorder %v311, 16
        %vm404 = vcmp.lt.s32.totalorder %v310, 272
        %vm405 = vcmp.lt.s32.totalorder %v311, 272
        %vm406 = vmand %vm402, %vm404
        %vm407 = vmand %vm403, %vm405
        %vm408 = vmand %vm406, %vm342
        %vm409 = vmand %vm407, %vm343
        %vm410 = vmand %vm408, %vm346
        %vm411 = vmand %vm409, %vm347
        %v412 = vsel %vm410, 1, 0
        %v413 = vsel %vm411, 1, 0
        %v414 = vcvt.s32.f32 %v412
        %v415 = vcvt.s32.f32 %v413
        %vm416 = vmand %vm406, %vm354
        %vm417 = vmand %vm407, %vm355
        %vm418 = vmand %vm416, %vm358
        %vm419 = vmand %vm417, %vm359
        %v420 = vsel %vm418, 1, 0
        %v421 = vsel %vm419, 1, 0
        %v422 = vcvt.s32.f32 %v420
        %v423 = vcvt.s32.f32 %v421
        %vm424 = vmand %vm406, %vm366
        %vm425 = vmand %vm407, %vm367
        %vm426 = vmand %vm424, %vm370
        %vm427 = vmand %vm425, %vm371
        %v428 = vsel %vm426, 1, 0
        %v429 = vsel %vm427, 1, 0
        %v430 = vcvt.s32.f32 %v428
        %v431 = vcvt.s32.f32 %v429
        %vm432 = vmand %vm406, %vm378
        %vm433 = vmand %vm407, %vm379
        %vm434 = vmand %vm432, %vm382
        %vm435 = vmand %vm433, %vm383
        %v436 = vsel %vm434, 1, 0
        %v437 = vsel %vm435, 1, 0
        %v438 = vcvt.s32.f32 %v436
        %v439 = vcvt.s32.f32 %v437
        %vm440 = vmand %vm406, %vm390
        %vm441 = vmand %vm407, %vm391
        %vm442 = vmand %vm440, %vm394
        %vm443 = vmand %vm441, %vm395
        %v444 = vsel %vm442, 1, 0
        %v445 = vsel %vm443, 1, 0
        %v446 = vcvt.s32.f32 %v444
        %v447 = vcvt.s32.f32 %v445
        %vm448 = vcmp.ge.s32.totalorder %v310, 0
        %vm449 = vcmp.ge.s32.totalorder %v311, 0
        %vm450 = vcmp.lt.s32.totalorder %v310, 256
        %vm451 = vcmp.lt.s32.totalorder %v311, 256
        %vm452 = vmand %vm448, %vm450
        %vm453 = vmand %vm449, %vm451
        %vm454 = vmand %vm452, %vm342
        %vm455 = vmand %vm453, %vm343
        %vm456 = vmand %vm454, %vm346
        %vm457 = vmand %vm455, %vm347
        %v458 = vsel %vm456, 1, 0
        %v459 = vsel %vm457, 1, 0
        %v460 = vcvt.s32.f32 %v458
        %v461 = vcvt.s32.f32 %v459
        %vm462 = vmand %vm452, %vm354
        %vm463 = vmand %vm453, %vm355
        %vm464 = vmand %vm462, %vm358
        %vm465 = vmand %vm463, %vm359
        %v466 = vsel %vm464, 1, 0
        %v467 = vsel %vm465, 1, 0
        %v468 = vcvt.s32.f32 %v466
        %v469 = vcvt.s32.f32 %v467
        %vm470 = vmand %vm452, %vm366
        %vm471 = vmand %vm453, %vm367
        %vm472 = vmand %vm470, %vm370
        %vm473 = vmand %vm471, %vm371
        %v474 = vsel %vm472, 1, 0
        %v475 = vsel %vm473, 1, 0
        %v476 = vcvt.s32.f32 %v474
        %v477 = vcvt.s32.f32 %v475
        %vm478 = vmand %vm452, %vm378
        %vm479 = vmand %vm453, %vm379
        %vm480 = vmand %vm478, %vm382
        %vm481 = vmand %vm479, %vm383
        %v482 = vsel %vm480, 1, 0
        %v483 = vsel %vm481, 1, 0
        %v484 = vcvt.s32.f32 %v482
        %v485 = vcvt.s32.f32 %v483
        %vm486 = vmand %vm452, %vm390
        %vm487 = vmand %vm453, %vm391
        %vm488 = vmand %vm486, %vm394
        %vm489 = vmand %vm487, %vm395
        %v490 = vsel %vm488, 1, 0
        %v491 = vsel %vm489, 1, 0
        %v492 = vcvt.s32.f32 %v490
        %v493 = vcvt.s32.f32 %v491
        %vm494 = vcmp.ge.s32.totalorder %v310, 4294967280
        %vm495 = vcmp.ge.s32.totalorder %v311, 4294967280
        %vm496 = vcmp.lt.s32.totalorder %v310, 240
        %vm497 = vcmp.lt.s32.totalorder %v311, 240
        %vm498 = vmand %vm494, %vm496
        %vm499 = vmand %vm495, %vm497
        %vm500 = vmand %vm498, %vm342
        %vm501 = vmand %vm499, %vm343
        %vm502 = vmand %vm500, %vm346
        %vm503 = vmand %vm501, %vm347
        %v504 = vsel %vm502, 1, 0
        %v505 = vsel %vm503, 1, 0
        %v506 = vcvt.s32.f32 %v504
        %v507 = vcvt.s32.f32 %v505
        %vm508 = vmand %vm498, %vm354
        %vm509 = vmand %vm499, %vm355
        %vm510 = vmand %vm508, %vm358
        %vm511 = vmand %vm509, %vm359
        %v512 = vsel %vm510, 1, 0
        %v513 = vsel %vm511, 1, 0
        %v514 = vcvt.s32.f32 %v512
        %v515 = vcvt.s32.f32 %v513
        %vm516 = vmand %vm498, %vm366
        %vm517 = vmand %vm499, %vm367
        %vm518 = vmand %vm516, %vm370
        %vm519 = vmand %vm517, %vm371
        %v520 = vsel %vm518, 1, 0
        %v521 = vsel %vm519, 1, 0
        %v522 = vcvt.s32.f32 %v520
        %v523 = vcvt.s32.f32 %v521
        %vm524 = vmand %vm498, %vm378
        %vm525 = vmand %vm499, %vm379
        %vm526 = vmand %vm524, %vm382
        %vm527 = vmand %vm525, %vm383
        %v528 = vsel %vm526, 1, 0
        %v529 = vsel %vm527, 1, 0
        %v530 = vcvt.s32.f32 %v528
        %v531 = vcvt.s32.f32 %v529
        %vm532 = vmand %vm498, %vm390
        %vm533 = vmand %vm499, %vm391
        %vm534 = vmand %vm532, %vm394
        %vm535 = vmand %vm533, %vm395
        %v536 = vsel %vm534, 1, 0
        %v537 = vsel %vm535, 1, 0
        %v538 = vcvt.s32.f32 %v536
        %v539 = vcvt.s32.f32 %v537
        %vm540 = vcmp.ge.s32.totalorder %v310, 4294967264
        %vm541 = vcmp.ge.s32.totalorder %v311, 4294967264
        %vm542 = vcmp.lt.s32.totalorder %v310, 224
        %vm543 = vcmp.lt.s32.totalorder %v311, 224
        %vm544 = vmand %vm540, %vm542
        %vm545 = vmand %vm541, %vm543
        %vm546 = vmand %vm544, %vm342
        %vm547 = vmand %vm545, %vm343
        %vm548 = vmand %vm546, %vm346
        %vm549 = vmand %vm547, %vm347
        %v550 = vsel %vm548, 1, 0
        %v551 = vsel %vm549, 1, 0
        %v552 = vcvt.s32.f32 %v550
        %v553 = vcvt.s32.f32 %v551
        %vm554 = vmand %vm544, %vm354
        %vm555 = vmand %vm545, %vm355
        %vm556 = vmand %vm554, %vm358
        %vm557 = vmand %vm555, %vm359
        %v558 = vsel %vm556, 1, 0
        %v559 = vsel %vm557, 1, 0
        %v560 = vcvt.s32.f32 %v558
        %v561 = vcvt.s32.f32 %v559
        %vm562 = vmand %vm544, %vm366
        %vm563 = vmand %vm545, %vm367
        %vm564 = vmand %vm562, %vm370
        %vm565 = vmand %vm563, %vm371
        %v566 = vsel %vm564, 1, 0
        %v567 = vsel %vm565, 1, 0
        %v568 = vcvt.s32.f32 %v566
        %v569 = vcvt.s32.f32 %v567
        %vm570 = vmand %vm544, %vm378
        %vm571 = vmand %vm545, %vm379
        %vm572 = vmand %vm570, %vm382
        %vm573 = vmand %vm571, %vm383
        %v574 = vsel %vm572, 1, 0
        %v575 = vsel %vm573, 1, 0
        %v576 = vcvt.s32.f32 %v574
        %v577 = vcvt.s32.f32 %v575
        %vm578 = vmand %vm544, %vm390
        %vm579 = vmand %vm545, %vm391
        %vm580 = vmand %vm578, %vm394
        %vm581 = vmand %vm579, %vm395
        %v582 = vsel %vm580, 1, 0
        %v583 = vsel %vm581, 1, 0
        %v584 = vcvt.s32.f32 %v582
        %v585 = vcvt.s32.f32 %v583
        %v586 = vld [vmem:[#allocation2] sm:$0xf]
        %v587 = vld [vmem:[%s6] sm:$0xf]
        %589 = vset.pattern.permute.xlu0 0
        %590 = vperm.xlu0 %589, %v587
        %v591 = vpop.permute.xlu0 %590
        %vm593 = vcmask 130048
        %v595 = vsel %vm593, %v586, 0
        %597 = vmatprep.subr.mxu0 %v306
        %598 = vmatpush1.msra.mxu0 %v305
        %599 = vmatprep.subr.mxu0 %v308
        %600 = vmatpush1.msra.mxu0 %v307
        %601 = vmatprep.subr.mxu0 0.0
        %602 = vmatpush1.msra.mxu0 0.0
        %603 = vmatprep.subr.mxu0 0.0
        %604 = vmatpush1.msra.mxu0 0.0
        %605 = vmatprep.subr.mxu0 0.0
        %606 = vmatpush1.msra.mxu0 0.0
        %607 = vmatprep.subr.mxu0 0.0
        %608 = vmatpush1.msra.mxu0 0.0
        %609 = vmatprep.subr.mxu0 0.0
        %610 = vmatpush1.msra.mxu0 0.0
        %611 = vmatprep.subr.mxu0 0.0
        %612 = vmatpush1.msra.mxu0 0.0
        %613 = vmatprep.subr.mxu0 0.0
        %614 = vmatpush1.msra.mxu0 0.0
        %615 = vmatprep.subr.mxu0 0.0
        %616 = vmatpush1.msra.mxu0 0.0
        %617 = vmatprep.subr.mxu0 0.0
        %618 = vmatpush1.msra.mxu0 0.0
        %619 = vmatprep.subr.mxu0 0.0
        %620 = vmatpush1.msra.mxu0 0.0
        %621 = vmatprep.subr.mxu0 0.0
        %622 = vmatpush1.msra.mxu0 0.0
        %623 = vmatprep.subr.mxu0 0.0
        %624 = vmatpush1.msra.mxu0 0.0
        %625 = vmatprep.subr.mxu0 0.0
        %626 = vmatpush1.msra.mxu0 0.0
        %627 = vmatprep.subr.mxu0 0.0
        %628 = vmatpush1.msra.mxu0 0.0
        %629 = vmatprep.subr.mxu0 0.0
        %630 = vmatpush1.msra.mxu0 0.0
        %631 = vmatprep.subr.mxu0 0.0
        %632 = vmatpush1.msra.mxu0 0.0
        %633 = vmatprep.subr.mxu0 0.0
        %634 = vmatpush1.msra.mxu0 0.0
        %635 = vmatprep.subr.mxu0 0.0
        %636 = vmatpush1.msra.mxu0 0.0
        %637 = vmatprep.subr.mxu0 0.0
        %638 = vmatpush1.msra.mxu0 0.0
        %639 = vmatprep.subr.mxu0 0.0
        %640 = vmatpush1.msra.mxu0 0.0
        %641 = vmatprep.subr.mxu0 0.0
        %642 = vmatpush1.msra.mxu0 0.0
        %643 = vmatprep.subr.mxu0 0.0
        %644 = vmatpush1.msra.mxu0 0.0
        %645 = vmatprep.subr.mxu0 0.0
        %646 = vmatpush1.msra.mxu0 0.0
        %647 = vmatprep.subr.mxu0 0.0
        %648 = vmatpush1.msra.mxu0 0.0
        %649 = vmatprep.subr.mxu0 0.0
        %650 = vmatpush1.msra.mxu0 0.0
        %651 = vmatprep.subr.mxu0 0.0
        %652 = vmatpush1.msra.mxu0 0.0
        %653 = vmatprep.subr.mxu0 0.0
        %654 = vmatpush1.msra.mxu0 0.0
        %655 = vmatprep.subr.mxu0 0.0
        %656 = vmatpush1.msra.mxu0 0.0
        %657 = vmatprep.subr.mxu0 0.0
        %658 = vmatpush1.msra.mxu0 0.0
        %659 = vmatprep.subr.mxu0 0.0
        %660 = vmatpush1.msra.mxu0 0.0
        %661 = vmatprep.mubr.f32.mxu0 0.0
        %662 = vmatmul.mubr.f32.gmra.mrb[0].mxu0 %v595
        %v663 = vpop.f32.mrb[0].mxu0
        %v664 = vadd.f32 %v591, %v663
        %v665 = vpop.f32.mrb[0].mxu0
        %v666 = vadd.f32 %v591, %v665
        %667 = vdwg.mxu0
        %v668 = vxor.u32 %v664, 2147483648
        %v669 = vxor.u32 %v666, 2147483648
        %v670 = vmul.f32 %v668, 1.442695
        %v671 = vpow.pop %v670
        %v672 = vmul.f32 %v669, 1.442695
        %v673 = vpow.pop %v672
        %v674 = vadd.f32 %v671, 1.0
        %v675 = vadd.f32 %v673, 1.0
        %v676 = vrcp.pop %v674
        %v677 = vmul.f32 1.0, %v676
        %v678 = vrcp.pop %v675
        %v679 = vmul.f32 1.0, %v678
        %v680 = vmul.f32 %v664, %v677
        %v681 = vmul.f32 %v666, %v679
        %v682 = vld [vmem:[#allocation5] sm:$0xf]
        %683 = vrot.lane.b32.xlu0 %v680, 34
        %v684 = vpop.permute.xlu0 %683
        %685 = vrot.lane.b32.xlu0 %v681, 34
        %v686 = vpop.permute.xlu0 %685
        %vm687 = vcmp.lt.s32.totalorder %v310, 34
        %v688 = vsel %vm687, %v684, %v686
        %v689 = vsel %vm687, %v686, %v684
        %v690 = vmul.f32 %v689, %v352
        %v691 = vmul.f32 %v688, %v353
        %693 = vset.pattern.permute.xlu0 0
        %694 = vperm.xlu0 %693, %v682
        %v695 = vpop.permute.xlu0 %694
        %v697 = vmul.f32 %v690, %v695
        %v698 = vmul.f32 %v691, %v695
        %v699 = vadd.f32 %v697, 0.0
        %v700 = vadd.f32 %v698, 0.0
        %701 = vrot.lane.b32.xlu0 %v680, 33
        %v702 = vpop.permute.xlu0 %701
        %703 = vrot.lane.b32.xlu0 %v681, 33
        %v704 = vpop.permute.xlu0 %703
        %vm705 = vcmp.lt.s32.totalorder %v310, 33
        %v706 = vsel %vm705, %v702, %v704
        %v707 = vsel %vm705, %v704, %v702
        %v708 = vmul.f32 %v707, %v364
        %v709 = vmul.f32 %v706, %v365
        %710 = vset.pattern.permute.xlu0 1
        %711 = vperm.xlu0 %710, %v682
        %v712 = vpop.permute.xlu0 %711
        %v714 = vmul.f32 %v708, %v712
        %v715 = vmul.f32 %v709, %v712
        %v716 = vadd.f32 %v699, %v714
        %v717 = vadd.f32 %v700, %v715
        %718 = vrot.lane.b32.xlu0 %v680, 32
        %v719 = vpop.permute.xlu0 %718
        %720 = vrot.lane.b32.xlu0 %v681, 32
        %v721 = vpop.permute.xlu0 %720
        %vm722 = vcmp.lt.s32.totalorder %v310, 32
        %v723 = vsel %vm722, %v719, %v721
        %v724 = vsel %vm722, %v721, %v719
        %v725 = vmul.f32 %v724, %v376
        %v726 = vmul.f32 %v723, %v377
        %727 = vset.pattern.permute.xlu0 2
        %728 = vperm.xlu0 %727, %v682
        %v729 = vpop.permute.xlu0 %728
        %v731 = vmul.f32 %v725, %v729
        %v732 = vmul.f32 %v726, %v729
        %v733 = vadd.f32 %v716, %v731
        %v734 = vadd.f32 %v717, %v732
        %735 = vrot.lane.b32.xlu0 %v680, 31
        %v736 = vpop.permute.xlu0 %735
        %737 = vrot.lane.b32.xlu0 %v681, 31
        %v738 = vpop.permute.xlu0 %737
        %vm739 = vcmp.lt.s32.totalorder %v310, 31
        %v740 = vsel %vm739, %v736, %v738
        %v741 = vsel %vm739, %v738, %v736
        %v742 = vmul.f32 %v741, %v388
        %v743 = vmul.f32 %v740, %v389
        %744 = vset.pattern.permute.xlu0 3
        %745 = vperm.xlu0 %744, %v682
        %v746 = vpop.permute.xlu0 %745
        %v748 = vmul.f32 %v742, %v746
        %v749 = vmul.f32 %v743, %v746
        %v750 = vadd.f32 %v733, %v748
        %v751 = vadd.f32 %v734, %v749
        %752 = vrot.lane.b32.xlu0 %v680, 30
        %v753 = vpop.permute.xlu0 %752
        %754 = vrot.lane.b32.xlu0 %v681, 30
        %v755 = vpop.permute.xlu0 %754
        %vm756 = vcmp.lt.s32.totalorder %v310, 30
        %v757 = vsel %vm756, %v753, %v755
        %v758 = vsel %vm756, %v755, %v753
        %v759 = vmul.f32 %v758, %v400
        %v760 = vmul.f32 %v757, %v401
        %761 = vset.pattern.permute.xlu0 4
        %762 = vperm.xlu0 %761, %v682
        %v763 = vpop.permute.xlu0 %762
        %v765 = vmul.f32 %v759, %v763
        %v766 = vmul.f32 %v760, %v763
        %v767 = vadd.f32 %v750, %v765
        %v768 = vadd.f32 %v751, %v766
        %769 = vrot.lane.b32.xlu0 %v680, 18
        %v770 = vpop.permute.xlu0 %769
        %771 = vrot.lane.b32.xlu0 %v681, 18
        %v772 = vpop.permute.xlu0 %771
        %vm773 = vcmp.lt.s32.totalorder %v310, 18
        %v774 = vsel %vm773, %v770, %v772
        %v775 = vsel %vm773, %v772, %v770
        %v776 = vmul.f32 %v775, %v414
        %v777 = vmul.f32 %v774, %v415
        %778 = vset.pattern.permute.xlu0 5
        %779 = vperm.xlu0 %778, %v682
        %v780 = vpop.permute.xlu0 %779
        %v782 = vmul.f32 %v776, %v780
        %v783 = vmul.f32 %v777, %v780
        %v784 = vadd.f32 %v767, %v782
        %v785 = vadd.f32 %v768, %v783
        %786 = vrot.lane.b32.xlu0 %v680, 17
        %v787 = vpop.permute.xlu0 %786
        %788 = vrot.lane.b32.xlu0 %v681, 17
        %v789 = vpop.permute.xlu0 %788
        %vm790 = vcmp.lt.s32.totalorder %v310, 17
        %v791 = vsel %vm790, %v787, %v789
        %v792 = vsel %vm790, %v789, %v787
        %v793 = vmul.f32 %v792, %v422
        %v794 = vmul.f32 %v791, %v423
        %795 = vset.pattern.permute.xlu0 6
        %796 = vperm.xlu0 %795, %v682
        %v797 = vpop.permute.xlu0 %796
        %v799 = vmul.f32 %v793, %v797
        %v800 = vmul.f32 %v794, %v797
        %v801 = vadd.f32 %v784, %v799
        %v802 = vadd.f32 %v785, %v800
        %803 = vrot.lane.b32.xlu0 %v680, 16
        %v804 = vpop.permute.xlu0 %803
        %805 = vrot.lane.b32.xlu0 %v681, 16
        %v806 = vpop.permute.xlu0 %805
        %vm807 = vcmp.lt.s32.totalorder %v310, 16
        %v808 = vsel %vm807, %v804, %v806
        %v809 = vsel %vm807, %v806, %v804
        %v810 = vmul.f32 %v809, %v430
        %v811 = vmul.f32 %v808, %v431
        %812 = vset.pattern.permute.xlu0 7
        %813 = vperm.xlu0 %812, %v682
        %v814 = vpop.permute.xlu0 %813
        %v816 = vmul.f32 %v810, %v814
        %v817 = vmul.f32 %v811, %v814
        %v818 = vadd.f32 %v801, %v816
        %v819 = vadd.f32 %v802, %v817
        %820 = vrot.lane.b32.xlu0 %v680, 15
        %v821 = vpop.permute.xlu0 %820
        %822 = vrot.lane.b32.xlu0 %v681, 15
        %v823 = vpop.permute.xlu0 %822
        %vm824 = vcmp.lt.s32.totalorder %v310, 15
        %v825 = vsel %vm824, %v821, %v823
        %v826 = vsel %vm824, %v823, %v821
        %v827 = vmul.f32 %v826, %v438
        %v828 = vmul.f32 %v825, %v439
        %829 = vset.pattern.permute.xlu0 8
        %830 = vperm.xlu0 %829, %v682
        %v831 = vpop.permute.xlu0 %830
        %v833 = vmul.f32 %v827, %v831
        %v834 = vmul.f32 %v828, %v831
        %v835 = vadd.f32 %v818, %v833
        %v836 = vadd.f32 %v819, %v834
        %837 = vrot.lane.b32.xlu0 %v680, 14
        %v838 = vpop.permute.xlu0 %837
        %839 = vrot.lane.b32.xlu0 %v681, 14
        %v840 = vpop.permute.xlu0 %839
        %vm841 = vcmp.lt.s32.totalorder %v310, 14
        %v842 = vsel %vm841, %v838, %v840
        %v843 = vsel %vm841, %v840, %v838
        %v844 = vmul.f32 %v843, %v446
        %v845 = vmul.f32 %v842, %v447
        %846 = vset.pattern.permute.xlu0 9
        %847 = vperm.xlu0 %846, %v682
        %v848 = vpop.permute.xlu0 %847
        %v850 = vmul.f32 %v844, %v848
        %v851 = vmul.f32 %v845, %v848
        %v852 = vadd.f32 %v835, %v850
        %v853 = vadd.f32 %v836, %v851
        %854 = vrot.lane.b32.xlu0 %v680, 2
        %v855 = vpop.permute.xlu0 %854
        %856 = vrot.lane.b32.xlu0 %v681, 2
        %v857 = vpop.permute.xlu0 %856
        %vm858 = vcmp.lt.s32.totalorder %v310, 2
        %v859 = vsel %vm858, %v855, %v857
        %v860 = vsel %vm858, %v857, %v855
        %v861 = vmul.f32 %v860, %v460
        %v862 = vmul.f32 %v859, %v461
        %863 = vset.pattern.permute.xlu0 10
        %864 = vperm.xlu0 %863, %v682
        %v865 = vpop.permute.xlu0 %864
        %v867 = vmul.f32 %v861, %v865
        %v868 = vmul.f32 %v862, %v865
        %v869 = vadd.f32 %v852, %v867
        %v870 = vadd.f32 %v853, %v868
        %871 = vrot.lane.b32.xlu0 %v680, 1
        %v872 = vpop.permute.xlu0 %871
        %873 = vrot.lane.b32.xlu0 %v681, 1
        %v874 = vpop.permute.xlu0 %873
        %vm875 = vcmp.lt.s32.totalorder %v310, 1
        %v876 = vsel %vm875, %v872, %v874
        %v877 = vsel %vm875, %v874, %v872
        %v878 = vmul.f32 %v877, %v468
        %v879 = vmul.f32 %v876, %v469
        %880 = vset.pattern.permute.xlu0 11
        %881 = vperm.xlu0 %880, %v682
        %v882 = vpop.permute.xlu0 %881
        %v884 = vmul.f32 %v878, %v882
        %v885 = vmul.f32 %v879, %v882
        %v886 = vadd.f32 %v869, %v884
        %v887 = vadd.f32 %v870, %v885
        %v888 = vmul.f32 %v680, %v476
        %v889 = vmul.f32 %v681, %v477
        %890 = vset.pattern.permute.xlu0 12
        %891 = vperm.xlu0 %890, %v682
        %v892 = vpop.permute.xlu0 %891
        %v894 = vmul.f32 %v888, %v892
        %v895 = vmul.f32 %v889, %v892
        %v896 = vadd.f32 %v886, %v894
        %v897 = vadd.f32 %v887, %v895
        %898 = vrot.lane.b32.xlu0 %v680, 127
        %v899 = vpop.permute.xlu0 %898
        %900 = vrot.lane.b32.xlu0 %v681, 127
        %v901 = vpop.permute.xlu0 %900
        %vm902 = vcmp.lt.s32.totalorder %v310, 127
        %v903 = vsel %vm902, %v899, %v901
        %v904 = vsel %vm902, %v901, %v899
        %v905 = vmul.f32 %v903, %v484
        %v906 = vmul.f32 %v904, %v485
        %907 = vset.pattern.permute.xlu0 13
        %908 = vperm.xlu0 %907, %v682
        %v909 = vpop.permute.xlu0 %908
        %v911 = vmul.f32 %v905, %v909
        %v912 = vmul.f32 %v906, %v909
        %v913 = vadd.f32 %v896, %v911
        %v914 = vadd.f32 %v897, %v912
        %915 = vrot.lane.b32.xlu0 %v680, 126
        %v916 = vpop.permute.xlu0 %915
        %917 = vrot.lane.b32.xlu0 %v681, 126
        %v918 = vpop.permute.xlu0 %917
        %vm919 = vcmp.lt.s32.totalorder %v310, 126
        %v920 = vsel %vm919, %v916, %v918
        %v921 = vsel %vm919, %v918, %v916
        %v922 = vmul.f32 %v920, %v492
        %v923 = vmul.f32 %v921, %v493
        %924 = vset.pattern.permute.xlu0 14
        %925 = vperm.xlu0 %924, %v682
        %v926 = vpop.permute.xlu0 %925
        %v928 = vmul.f32 %v922, %v926
        %v929 = vmul.f32 %v923, %v926
        %v930 = vadd.f32 %v913, %v928
        %v931 = vadd.f32 %v914, %v929
        %932 = vrot.lane.b32.xlu0 %v680, 114
        %v933 = vpop.permute.xlu0 %932
        %934 = vrot.lane.b32.xlu0 %v681, 114
        %v935 = vpop.permute.xlu0 %934
        %vm936 = vcmp.lt.s32.totalorder %v310, 114
        %v937 = vsel %vm936, %v933, %v935
        %v938 = vsel %vm936, %v935, %v933
        %v939 = vmul.f32 %v937, %v506
        %v940 = vmul.f32 %v938, %v507
        %941 = vset.pattern.permute.xlu0 15
        %942 = vperm.xlu0 %941, %v682
        %v943 = vpop.permute.xlu0 %942
        %v945 = vmul.f32 %v939, %v943
        %v946 = vmul.f32 %v940, %v943
        %v947 = vadd.f32 %v930, %v945
        %v948 = vadd.f32 %v931, %v946
        %949 = vrot.lane.b32.xlu0 %v680, 113
        %v950 = vpop.permute.xlu0 %949
        %951 = vrot.lane.b32.xlu0 %v681, 113
        %v952 = vpop.permute.xlu0 %951
        %vm953 = vcmp.lt.s32.totalorder %v310, 113
        %v954 = vsel %vm953, %v950, %v952
        %v955 = vsel %vm953, %v952, %v950
        %v956 = vmul.f32 %v954, %v514
        %v957 = vmul.f32 %v955, %v515
        %958 = vset.pattern.permute.xlu0 16
        %959 = vperm.xlu0 %958, %v682
        %v960 = vpop.permute.xlu0 %959
        %v962 = vmul.f32 %v956, %v960
        %v963 = vmul.f32 %v957, %v960
        %v964 = vadd.f32 %v947, %v962
        %v965 = vadd.f32 %v948, %v963
        %966 = vrot.lane.b32.xlu0 %v680, 112
        %v967 = vpop.permute.xlu0 %966
        %968 = vrot.lane.b32.xlu0 %v681, 112
        %v969 = vpop.permute.xlu0 %968
        %vm970 = vcmp.lt.s32.totalorder %v310, 112
        %v971 = vsel %vm970, %v967, %v969
        %v972 = vsel %vm970, %v969, %v967
        %v973 = vmul.f32 %v971, %v522
        %v974 = vmul.f32 %v972, %v523
        %975 = vset.pattern.permute.xlu0 17
        %976 = vperm.xlu0 %975, %v682
        %v977 = vpop.permute.xlu0 %976
        %v979 = vmul.f32 %v973, %v977
        %v980 = vmul.f32 %v974, %v977
        %v981 = vadd.f32 %v964, %v979
        %v982 = vadd.f32 %v965, %v980
        %983 = vrot.lane.b32.xlu0 %v680, 111
        %v984 = vpop.permute.xlu0 %983
        %985 = vrot.lane.b32.xlu0 %v681, 111
        %v986 = vpop.permute.xlu0 %985
        %vm987 = vcmp.lt.s32.totalorder %v310, 111
        %v988 = vsel %vm987, %v984, %v986
        %v989 = vsel %vm987, %v986, %v984
        %v990 = vmul.f32 %v988, %v530
        %v991 = vmul.f32 %v989, %v531
        %992 = vset.pattern.permute.xlu0 18
        %993 = vperm.xlu0 %992, %v682
        %v994 = vpop.permute.xlu0 %993
        %v996 = vmul.f32 %v990, %v994
        %v997 = vmul.f32 %v991, %v994
        %v998 = vadd.f32 %v981, %v996
        %v999 = vadd.f32 %v982, %v997
        %1000 = vrot.lane.b32.xlu0 %v680, 110
        %v1001 = vpop.permute.xlu0 %1000
        %1002 = vrot.lane.b32.xlu0 %v681, 110
        %v1003 = vpop.permute.xlu0 %1002
        %vm1004 = vcmp.lt.s32.totalorder %v310, 110
        %v1005 = vsel %vm1004, %v1001, %v1003
        %v1006 = vsel %vm1004, %v1003, %v1001
        %v1007 = vmul.f32 %v1005, %v538
        %v1008 = vmul.f32 %v1006, %v539
        %1009 = vset.pattern.permute.xlu0 19
        %1010 = vperm.xlu0 %1009, %v682
        %v1011 = vpop.permute.xlu0 %1010
        %v1013 = vmul.f32 %v1007, %v1011
        %v1014 = vmul.f32 %v1008, %v1011
        %v1015 = vadd.f32 %v998, %v1013
        %v1016 = vadd.f32 %v999, %v1014
        %1017 = vrot.lane.b32.xlu0 %v680, 98
        %v1018 = vpop.permute.xlu0 %1017
        %1019 = vrot.lane.b32.xlu0 %v681, 98
        %v1020 = vpop.permute.xlu0 %1019
        %vm1021 = vcmp.lt.s32.totalorder %v310, 98
        %v1022 = vsel %vm1021, %v1018, %v1020
        %v1023 = vsel %vm1021, %v1020, %v1018
        %v1024 = vmul.f32 %v1022, %v552
        %v1025 = vmul.f32 %v1023, %v553
        %1026 = vset.pattern.permute.xlu0 20
        %1027 = vperm.xlu0 %1026, %v682
        %v1028 = vpop.permute.xlu0 %1027
        %v1030 = vmul.f32 %v1024, %v1028
        %v1031 = vmul.f32 %v1025, %v1028
        %v1032 = vadd.f32 %v1015, %v1030
        %v1033 = vadd.f32 %v1016, %v1031
        %1034 = vrot.lane.b32.xlu0 %v680, 97
        %v1035 = vpop.permute.xlu0 %1034
        %1036 = vrot.lane.b32.xlu0 %v681, 97
        %v1037 = vpop.permute.xlu0 %1036
        %vm1038 = vcmp.lt.s32.totalorder %v310, 97
        %v1039 = vsel %vm1038, %v1035, %v1037
        %v1040 = vsel %vm1038, %v1037, %v1035
        %v1041 = vmul.f32 %v1039, %v560
        %v1042 = vmul.f32 %v1040, %v561
        %1043 = vset.pattern.permute.xlu0 21
        %1044 = vperm.xlu0 %1043, %v682
        %v1045 = vpop.permute.xlu0 %1044
        %v1047 = vmul.f32 %v1041, %v1045
        %v1048 = vmul.f32 %v1042, %v1045
        %v1049 = vadd.f32 %v1032, %v1047
        %v1050 = vadd.f32 %v1033, %v1048
        %1051 = vrot.lane.b32.xlu0 %v680, 96
        %v1052 = vpop.permute.xlu0 %1051
        %1053 = vrot.lane.b32.xlu0 %v681, 96
        %v1054 = vpop.permute.xlu0 %1053
        %vm1055 = vcmp.lt.s32.totalorder %v310, 96
        %v1056 = vsel %vm1055, %v1052, %v1054
        %v1057 = vsel %vm1055, %v1054, %v1052
        %v1058 = vmul.f32 %v1056, %v568
        %v1059 = vmul.f32 %v1057, %v569
        %1060 = vset.pattern.permute.xlu0 22
        %1061 = vperm.xlu0 %1060, %v682
        %v1062 = vpop.permute.xlu0 %1061
        %v1064 = vmul.f32 %v1058, %v1062
        %v1065 = vmul.f32 %v1059, %v1062
        %v1066 = vadd.f32 %v1049, %v1064
        %v1067 = vadd.f32 %v1050, %v1065
        %1068 = vrot.lane.b32.xlu0 %v680, 95
        %v1069 = vpop.permute.xlu0 %1068
        %1070 = vrot.lane.b32.xlu0 %v681, 95
        %v1071 = vpop.permute.xlu0 %1070
        %vm1072 = vcmp.lt.s32.totalorder %v310, 95
        %v1073 = vsel %vm1072, %v1069, %v1071
        %v1074 = vsel %vm1072, %v1071, %v1069
        %v1075 = vmul.f32 %v1073, %v576
        %v1076 = vmul.f32 %v1074, %v577
        %1077 = vset.pattern.permute.xlu0 23
        %1078 = vperm.xlu0 %1077, %v682
        %v1079 = vpop.permute.xlu0 %1078
        %v1081 = vmul.f32 %v1075, %v1079
        %v1082 = vmul.f32 %v1076, %v1079
        %v1083 = vadd.f32 %v1066, %v1081
        %v1084 = vadd.f32 %v1067, %v1082
        %1085 = vrot.lane.b32.xlu0 %v680, 94
        %v1086 = vpop.permute.xlu0 %1085
        %1087 = vrot.lane.b32.xlu0 %v681, 94
        %v1088 = vpop.permute.xlu0 %1087
        %vm1089 = vcmp.lt.s32.totalorder %v310, 94
        %v1090 = vsel %vm1089, %v1086, %v1088
        %v1091 = vsel %vm1089, %v1088, %v1086
        %v1092 = vmul.f32 %v1090, %v584
        %v1093 = vmul.f32 %v1091, %v585
        %1094 = vset.pattern.permute.xlu0 24
        %1095 = vperm.xlu0 %1094, %v682
        %v1096 = vpop.permute.xlu0 %1095
        %v1098 = vmul.f32 %v1092, %v1096
        %v1099 = vmul.f32 %v1093, %v1096
        %v1100 = vadd.f32 %v1083, %v1098
        %v1101 = vadd.f32 %v1084, %v1099
        %1102 = vset.pattern.permute.xlu0 1
        %1103 = vperm.xlu0 %1102, %v587
        %v1104 = vpop.permute.xlu0 %1103
        %v1106 = vadd.f32 %v1100, %v1104
        %v1107 = vadd.f32 %v1101, %v1104
        %v1108 = vxor.u32 %v1106, 2147483648
        %v1109 = vxor.u32 %v1107, 2147483648
        %v1110 = vmul.f32 %v1108, 1.442695
        %v1111 = vpow.pop %v1110
        %v1112 = vmul.f32 %v1109, 1.442695
        %v1113 = vpow.pop %v1112
        %v1114 = vadd.f32 %v1111, 1.0
        %v1115 = vadd.f32 %v1113, 1.0
        %v1116 = vrcp.pop %v1114
        %v1117 = vmul.f32 1.0, %v1116
        %v1118 = vrcp.pop %v1115
        %v1119 = vmul.f32 1.0, %v1118
        %v1120 = vmul.f32 %v1106, %v1117
        %v1121 = vmul.f32 %v1107, %v1119
        %v1122 = vld [vmem:[%s2] sm:$0xff]
        %v1123 = vld [vmem:[%s3] sm:$0xff]
        %vm1124 = vcmask 31744
        %v1126 = vsel %vm1124, %v1123, 0
        %vm1128 = vcmask 1043456
        %v1130 = vsel %vm1128, %v1120, 0
        %v1133 = vsel %vm1128, %v1121, 0
        %1135 = vmatprep.subr.mxu0 %v1133
        %1136 = vmatpush1.msra.mxu0 %v1130
        %1137 = vmatprep.subr.mxu0 0.0
        %1138 = vmatpush1.msra.mxu0 0.0
        %1139 = vmatprep.subr.mxu0 0.0
        %1140 = vmatpush1.msra.mxu0 0.0
        %1141 = vmatprep.subr.mxu0 0.0
        %1142 = vmatpush1.msra.mxu0 0.0
        %1143 = vmatprep.subr.mxu0 0.0
        %1144 = vmatpush1.msra.mxu0 0.0
        %1145 = vmatprep.subr.mxu0 0.0
        %1146 = vmatpush1.msra.mxu0 0.0
        %1147 = vmatprep.subr.mxu0 0.0
        %1148 = vmatpush1.msra.mxu0 0.0
        %1149 = vmatprep.subr.mxu0 0.0
        %1150 = vmatpush1.msra.mxu0 0.0
        %1151 = vmatprep.subr.mxu0 0.0
        %1152 = vmatpush1.msra.mxu0 0.0
        %1153 = vmatprep.subr.mxu0 0.0
        %1154 = vmatpush1.msra.mxu0 0.0
        %1155 = vmatprep.subr.mxu0 0.0
        %1156 = vmatpush1.msra.mxu0 0.0
        %1157 = vmatprep.subr.mxu0 0.0
        %1158 = vmatpush1.msra.mxu0 0.0
        %1159 = vmatprep.subr.mxu0 0.0
        %1160 = vmatpush1.msra.mxu0 0.0
        %1161 = vmatprep.subr.mxu0 0.0
        %1162 = vmatpush1.msra.mxu0 0.0
        %1163 = vmatprep.subr.mxu0 0.0
        %1164 = vmatpush1.msra.mxu0 0.0
        %1165 = vmatprep.subr.mxu0 0.0
        %1166 = vmatpush1.msra.mxu0 0.0
        %1167 = vmatprep.subr.mxu0 0.0
        %1168 = vmatpush1.msra.mxu0 0.0
        %1169 = vmatprep.subr.mxu0 0.0
        %1170 = vmatpush1.msra.mxu0 0.0
        %1171 = vmatprep.subr.mxu0 0.0
        %1172 = vmatpush1.msra.mxu0 0.0
        %1173 = vmatprep.subr.mxu0 0.0
        %1174 = vmatpush1.msra.mxu0 0.0
        %1175 = vmatprep.subr.mxu0 0.0
        %1176 = vmatpush1.msra.mxu0 0.0
        %1177 = vmatprep.subr.mxu0 0.0
        %1178 = vmatpush1.msra.mxu0 0.0
        %1179 = vmatprep.subr.mxu0 0.0
        %1180 = vmatpush1.msra.mxu0 0.0
        %1181 = vmatprep.subr.mxu0 0.0
        %1182 = vmatpush1.msra.mxu0 0.0
        %1183 = vmatprep.subr.mxu0 0.0
        %1184 = vmatpush1.msra.mxu0 0.0
        %1185 = vmatprep.subr.mxu0 0.0
        %1186 = vmatpush1.msra.mxu0 0.0
        %1187 = vmatprep.subr.mxu0 0.0
        %1188 = vmatpush1.msra.mxu0 0.0
        %1189 = vmatprep.subr.mxu0 0.0
        %1190 = vmatpush1.msra.mxu0 0.0
        %1191 = vmatprep.subr.mxu0 0.0
        %1192 = vmatpush1.msra.mxu0 0.0
        %1193 = vmatprep.subr.mxu0 0.0
        %1194 = vmatpush1.msra.mxu0 0.0
        %1195 = vmatprep.subr.mxu0 0.0
        %1196 = vmatpush1.msra.mxu0 0.0
        %1197 = vmatprep.subr.mxu0 0.0
        %1198 = vmatpush1.msra.mxu0 0.0
        %1199 = vmatprep.mubr.f32.mxu0 0.0
        %1200 = vmatmul.mubr.f32.gmra.mrb[0].mxu0 %v1126
        %v1201 = vpop.f32.mrb[0].mxu0
        %v1202 = vadd.f32 0.0, %v1201
        %v1203 = vpop.f32.mrb[0].mxu0
        %v1204 = vadd.f32 0.0, %v1203
        %1205 = vdwg.mxu0
        %v1207 = vsel %vm1124, %v1122, 0
        %v1210 = vsel %vm1128, %v680, 0
        %v1213 = vsel %vm1128, %v681, 0
        %1215 = vmatprep.subr.mxu0 %v1213
        %1216 = vmatpush1.msra.mxu0 %v1210
        %1217 = vmatprep.subr.mxu0 0.0
        %1218 = vmatpush1.msra.mxu0 0.0
        %1219 = vmatprep.subr.mxu0 0.0
        %1220 = vmatpush1.msra.mxu0 0.0
        %1221 = vmatprep.subr.mxu0 0.0
        %1222 = vmatpush1.msra.mxu0 0.0
        %1223 = vmatprep.subr.mxu0 0.0
        %1224 = vmatpush1.msra.mxu0 0.0
        %1225 = vmatprep.subr.mxu0 0.0
        %1226 = vmatpush1.msra.mxu0 0.0
        %1227 = vmatprep.subr.mxu0 0.0
        %1228 = vmatpush1.msra.mxu0 0.0
        %1229 = vmatprep.subr.mxu0 0.0
        %1230 = vmatpush1.msra.mxu0 0.0
        %1231 = vmatprep.subr.mxu0 0.0
        %1232 = vmatpush1.msra.mxu0 0.0
        %1233 = vmatprep.subr.mxu0 0.0
        %1234 = vmatpush1.msra.mxu0 0.0
        %1235 = vmatprep.subr.mxu0 0.0
        %1236 = vmatpush1.msra.mxu0 0.0
        %1237 = vmatprep.subr.mxu0 0.0
        %1238 = vmatpush1.msra.mxu0 0.0
        %1239 = vmatprep.subr.mxu0 0.0
        %1240 = vmatpush1.msra.mxu0 0.0
        %1241 = vmatprep.subr.mxu0 0.0
        %1242 = vmatpush1.msra.mxu0 0.0
        %1243 = vmatprep.subr.mxu0 0.0
        %1244 = vmatpush1.msra.mxu0 0.0
        %1245 = vmatprep.subr.mxu0 0.0
        %1246 = vmatpush1.msra.mxu0 0.0
        %1247 = vmatprep.subr.mxu0 0.0
        %1248 = vmatpush1.msra.mxu0 0.0
        %1249 = vmatprep.subr.mxu0 0.0
        %1250 = vmatpush1.msra.mxu0 0.0
        %1251 = vmatprep.subr.mxu0 0.0
        %1252 = vmatpush1.msra.mxu0 0.0
        %1253 = vmatprep.subr.mxu0 0.0
        %1254 = vmatpush1.msra.mxu0 0.0
        %1255 = vmatprep.subr.mxu0 0.0
        %1256 = vmatpush1.msra.mxu0 0.0
        %1257 = vmatprep.subr.mxu0 0.0
        %1258 = vmatpush1.msra.mxu0 0.0
        %1259 = vmatprep.subr.mxu0 0.0
        %1260 = vmatpush1.msra.mxu0 0.0
        %1261 = vmatprep.subr.mxu0 0.0
        %1262 = vmatpush1.msra.mxu0 0.0
        %1263 = vmatprep.subr.mxu0 0.0
        %1264 = vmatpush1.msra.mxu0 0.0
        %1265 = vmatprep.subr.mxu0 0.0
        %1266 = vmatpush1.msra.mxu0 0.0
        %1267 = vmatprep.subr.mxu0 0.0
        %1268 = vmatpush1.msra.mxu0 0.0
        %1269 = vmatprep.subr.mxu0 0.0
        %1270 = vmatpush1.msra.mxu0 0.0
        %1271 = vmatprep.subr.mxu0 0.0
        %1272 = vmatpush1.msra.mxu0 0.0
        %1273 = vmatprep.subr.mxu0 0.0
        %1274 = vmatpush1.msra.mxu0 0.0
        %1275 = vmatprep.subr.mxu0 0.0
        %1276 = vmatpush1.msra.mxu0 0.0
        %1277 = vmatprep.subr.mxu0 0.0
        %1278 = vmatpush1.msra.mxu0 0.0
        %1279 = vmatprep.mubr.f32.mxu0 0.0
        %1280 = vmatmul.mubr.f32.gmra.mrb[0].mxu0 %v1207
        %v1281 = vpop.f32.mrb[0].mxu0
        %v1282 = vadd.f32 %v1202, %v1281
        %v1283 = vpop.f32.mrb[0].mxu0
        %v1284 = vadd.f32 %v1204, %v1283
        %1285 = vdwg.mxu0
        %v1286 = vld [vmem:[%s6] sm:$0xff]
        %1288 = vset.pattern.permute.xlu0 2
        %1289 = vperm.xlu0 %1288, %v1286
        %v1290 = vpop.permute.xlu0 %1289
        %v1292 = vadd.f32 %v1282, %v1290
        %v1293 = vadd.f32 %v1284, %v1290
        %v1294 = vld [vmem:[%s5] sm:$0xff]
        %1295 = vrot.lane.b32.xlu0 %v1292, 34
        %v1296 = vpop.permute.xlu0 %1295
        %1297 = vrot.lane.b32.xlu0 %v1293, 34
        %v1298 = vpop.permute.xlu0 %1297
        %v1299 = vsel %vm687, %v1296, %v1298
        %v1300 = vsel %vm687, %v1298, %v1296
        %v1301 = vmul.f32 %v1300, %v352
        %v1302 = vmul.f32 %v1299, %v353
        %1304 = vset.pattern.permute.xlu0 0
        %1305 = vperm.xlu0 %1304, %v1294
        %v1306 = vpop.permute.xlu0 %1305
        %v1308 = vmul.f32 %v1301, %v1306
        %v1309 = vmul.f32 %v1302, %v1306
        %v1310 = vadd.f32 %v1308, 0.0
        %v1311 = vadd.f32 %v1309, 0.0
        %1312 = vrot.lane.b32.xlu0 %v1292, 33
        %v1313 = vpop.permute.xlu0 %1312
        %1314 = vrot.lane.b32.xlu0 %v1293, 33
        %v1315 = vpop.permute.xlu0 %1314
        %v1316 = vsel %vm705, %v1313, %v1315
        %v1317 = vsel %vm705, %v1315, %v1313
        %v1318 = vmul.f32 %v1317, %v364
        %v1319 = vmul.f32 %v1316, %v365
        %1320 = vset.pattern.permute.xlu0 1
        %1321 = vperm.xlu0 %1320, %v1294
        %v1322 = vpop.permute.xlu0 %1321
        %v1324 = vmul.f32 %v1318, %v1322
        %v1325 = vmul.f32 %v1319, %v1322
        %v1326 = vadd.f32 %v1310, %v1324
        %v1327 = vadd.f32 %v1311, %v1325
        %1328 = vrot.lane.b32.xlu0 %v1292, 32
        %v1329 = vpop.permute.xlu0 %1328
        %1330 = vrot.lane.b32.xlu0 %v1293, 32
        %v1331 = vpop.permute.xlu0 %1330
        %v1332 = vsel %vm722, %v1329, %v1331
        %v1333 = vsel %vm722, %v1331, %v1329
        %v1334 = vmul.f32 %v1333, %v376
        %v1335 = vmul.f32 %v1332, %v377
        %1336 = vset.pattern.permute.xlu0 2
        %1337 = vperm.xlu0 %1336, %v1294
        %v1338 = vpop.permute.xlu0 %1337
        %v1340 = vmul.f32 %v1334, %v1338
        %v1341 = vmul.f32 %v1335, %v1338
        %v1342 = vadd.f32 %v1326, %v1340
        %v1343 = vadd.f32 %v1327, %v1341
        %1344 = vrot.lane.b32.xlu0 %v1292, 31
        %v1345 = vpop.permute.xlu0 %1344
        %1346 = vrot.lane.b32.xlu0 %v1293, 31
        %v1347 = vpop.permute.xlu0 %1346
        %v1348 = vsel %vm739, %v1345, %v1347
        %v1349 = vsel %vm739, %v1347, %v1345
        %v1350 = vmul.f32 %v1349, %v388
        %v1351 = vmul.f32 %v1348, %v389
        %1352 = vset.pattern.permute.xlu0 3
        %1353 = vperm.xlu0 %1352, %v1294
        %v1354 = vpop.permute.xlu0 %1353
        %v1356 = vmul.f32 %v1350, %v1354
        %v1357 = vmul.f32 %v1351, %v1354
        %v1358 = vadd.f32 %v1342, %v1356
        %v1359 = vadd.f32 %v1343, %v1357
        %1360 = vrot.lane.b32.xlu0 %v1292, 30
        %v1361 = vpop.permute.xlu0 %1360
        %1362 = vrot.lane.b32.xlu0 %v1293, 30
        %v1363 = vpop.permute.xlu0 %1362
        %v1364 = vsel %vm756, %v1361, %v1363
        %v1365 = vsel %vm756, %v1363, %v1361
        %v1366 = vmul.f32 %v1365, %v400
        %v1367 = vmul.f32 %v1364, %v401
        %1368 = vset.pattern.permute.xlu0 4
        %1369 = vperm.xlu0 %1368, %v1294
        %v1370 = vpop.permute.xlu0 %1369
        %v1372 = vmul.f32 %v1366, %v1370
        %v1373 = vmul.f32 %v1367, %v1370
        %v1374 = vadd.f32 %v1358, %v1372
        %v1375 = vadd.f32 %v1359, %v1373
        %1376 = vrot.lane.b32.xlu0 %v1292, 18
        %v1377 = vpop.permute.xlu0 %1376
        %1378 = vrot.lane.b32.xlu0 %v1293, 18
        %v1379 = vpop.permute.xlu0 %1378
        %v1380 = vsel %vm773, %v1377, %v1379
        %v1381 = vsel %vm773, %v1379, %v1377
        %v1382 = vmul.f32 %v1381, %v414
        %v1383 = vmul.f32 %v1380, %v415
        %1384 = vset.pattern.permute.xlu0 5
        %1385 = vperm.xlu0 %1384, %v1294
        %v1386 = vpop.permute.xlu0 %1385
        %v1388 = vmul.f32 %v1382, %v1386
        %v1389 = vmul.f32 %v1383, %v1386
        %v1390 = vadd.f32 %v1374, %v1388
        %v1391 = vadd.f32 %v1375, %v1389
        %1392 = vrot.lane.b32.xlu0 %v1292, 17
        %v1393 = vpop.permute.xlu0 %1392
        %1394 = vrot.lane.b32.xlu0 %v1293, 17
        %v1395 = vpop.permute.xlu0 %1394
        %v1396 = vsel %vm790, %v1393, %v1395
        %v1397 = vsel %vm790, %v1395, %v1393
        %v1398 = vmul.f32 %v1397, %v422
        %v1399 = vmul.f32 %v1396, %v423
        %1400 = vset.pattern.permute.xlu0 6
        %1401 = vperm.xlu0 %1400, %v1294
        %v1402 = vpop.permute.xlu0 %1401
        %v1404 = vmul.f32 %v1398, %v1402
        %v1405 = vmul.f32 %v1399, %v1402
        %v1406 = vadd.f32 %v1390, %v1404
        %v1407 = vadd.f32 %v1391, %v1405
        %1408 = vrot.lane.b32.xlu0 %v1292, 16
        %v1409 = vpop.permute.xlu0 %1408
        %1410 = vrot.lane.b32.xlu0 %v1293, 16
        %v1411 = vpop.permute.xlu0 %1410
        %v1412 = vsel %vm807, %v1409, %v1411
        %v1413 = vsel %vm807, %v1411, %v1409
        %v1414 = vmul.f32 %v1413, %v430
        %v1415 = vmul.f32 %v1412, %v431
        %1416 = vset.pattern.permute.xlu0 7
        %1417 = vperm.xlu0 %1416, %v1294
        %v1418 = vpop.permute.xlu0 %1417
        %v1420 = vmul.f32 %v1414, %v1418
        %v1421 = vmul.f32 %v1415, %v1418
        %v1422 = vadd.f32 %v1406, %v1420
        %v1423 = vadd.f32 %v1407, %v1421
        %1424 = vrot.lane.b32.xlu0 %v1292, 15
        %v1425 = vpop.permute.xlu0 %1424
        %1426 = vrot.lane.b32.xlu0 %v1293, 15
        %v1427 = vpop.permute.xlu0 %1426
        %v1428 = vsel %vm824, %v1425, %v1427
        %v1429 = vsel %vm824, %v1427, %v1425
        %v1430 = vmul.f32 %v1429, %v438
        %v1431 = vmul.f32 %v1428, %v439
        %1432 = vset.pattern.permute.xlu0 8
        %1433 = vperm.xlu0 %1432, %v1294
        %v1434 = vpop.permute.xlu0 %1433
        %v1436 = vmul.f32 %v1430, %v1434
        %v1437 = vmul.f32 %v1431, %v1434
        %v1438 = vadd.f32 %v1422, %v1436
        %v1439 = vadd.f32 %v1423, %v1437
        %1440 = vrot.lane.b32.xlu0 %v1292, 14
        %v1441 = vpop.permute.xlu0 %1440
        %1442 = vrot.lane.b32.xlu0 %v1293, 14
        %v1443 = vpop.permute.xlu0 %1442
        %v1444 = vsel %vm841, %v1441, %v1443
        %v1445 = vsel %vm841, %v1443, %v1441
        %v1446 = vmul.f32 %v1445, %v446
        %v1447 = vmul.f32 %v1444, %v447
        %1448 = vset.pattern.permute.xlu0 9
        %1449 = vperm.xlu0 %1448, %v1294
        %v1450 = vpop.permute.xlu0 %1449
        %v1452 = vmul.f32 %v1446, %v1450
        %v1453 = vmul.f32 %v1447, %v1450
        %v1454 = vadd.f32 %v1438, %v1452
        %v1455 = vadd.f32 %v1439, %v1453
        %1456 = vrot.lane.b32.xlu0 %v1292, 2
        %v1457 = vpop.permute.xlu0 %1456
        %1458 = vrot.lane.b32.xlu0 %v1293, 2
        %v1459 = vpop.permute.xlu0 %1458
        %v1460 = vsel %vm858, %v1457, %v1459
        %v1461 = vsel %vm858, %v1459, %v1457
        %v1462 = vmul.f32 %v1461, %v460
        %v1463 = vmul.f32 %v1460, %v461
        %1464 = vset.pattern.permute.xlu0 10
        %1465 = vperm.xlu0 %1464, %v1294
        %v1466 = vpop.permute.xlu0 %1465
        %v1468 = vmul.f32 %v1462, %v1466
        %v1469 = vmul.f32 %v1463, %v1466
        %v1470 = vadd.f32 %v1454, %v1468
        %v1471 = vadd.f32 %v1455, %v1469
        %1472 = vrot.lane.b32.xlu0 %v1292, 1
        %v1473 = vpop.permute.xlu0 %1472
        %1474 = vrot.lane.b32.xlu0 %v1293, 1
        %v1475 = vpop.permute.xlu0 %1474
        %v1476 = vsel %vm875, %v1473, %v1475
        %v1477 = vsel %vm875, %v1475, %v1473
        %v1478 = vmul.f32 %v1477, %v468
        %v1479 = vmul.f32 %v1476, %v469
        %1480 = vset.pattern.permute.xlu0 11
        %1481 = vperm.xlu0 %1480, %v1294
        %v1482 = vpop.permute.xlu0 %1481
        %v1484 = vmul.f32 %v1478, %v1482
        %v1485 = vmul.f32 %v1479, %v1482
        %v1486 = vadd.f32 %v1470, %v1484
        %v1487 = vadd.f32 %v1471, %v1485
        %v1488 = vmul.f32 %v1292, %v476
        %v1489 = vmul.f32 %v1293, %v477
        %1490 = vset.pattern.permute.xlu0 12
        %1491 = vperm.xlu0 %1490, %v1294
        %v1492 = vpop.permute.xlu0 %1491
        %v1494 = vmul.f32 %v1488, %v1492
        %v1495 = vmul.f32 %v1489, %v1492
        %v1496 = vadd.f32 %v1486, %v1494
        %v1497 = vadd.f32 %v1487, %v1495
        %1498 = vrot.lane.b32.xlu0 %v1292, 127
        %v1499 = vpop.permute.xlu0 %1498
        %1500 = vrot.lane.b32.xlu0 %v1293, 127
        %v1501 = vpop.permute.xlu0 %1500
        %v1502 = vsel %vm902, %v1499, %v1501
        %v1503 = vsel %vm902, %v1501, %v1499
        %v1504 = vmul.f32 %v1502, %v484
        %v1505 = vmul.f32 %v1503, %v485
        %1506 = vset.pattern.permute.xlu0 13
        %1507 = vperm.xlu0 %1506, %v1294
        %v1508 = vpop.permute.xlu0 %1507
        %v1510 = vmul.f32 %v1504, %v1508
        %v1511 = vmul.f32 %v1505, %v1508
        %v1512 = vadd.f32 %v1496, %v1510
        %v1513 = vadd.f32 %v1497, %v1511
        %1514 = vrot.lane.b32.xlu0 %v1292, 126
        %v1515 = vpop.permute.xlu0 %1514
        %1516 = vrot.lane.b32.xlu0 %v1293, 126
        %v1517 = vpop.permute.xlu0 %1516
        %v1518 = vsel %vm919, %v1515, %v1517
        %v1519 = vsel %vm919, %v1517, %v1515
        %v1520 = vmul.f32 %v1518, %v492
        %v1521 = vmul.f32 %v1519, %v493
        %1522 = vset.pattern.permute.xlu0 14
        %1523 = vperm.xlu0 %1522, %v1294
        %v1524 = vpop.permute.xlu0 %1523
        %v1526 = vmul.f32 %v1520, %v1524
        %v1527 = vmul.f32 %v1521, %v1524
        %v1528 = vadd.f32 %v1512, %v1526
        %v1529 = vadd.f32 %v1513, %v1527
        %1530 = vrot.lane.b32.xlu0 %v1292, 114
        %v1531 = vpop.permute.xlu0 %1530
        %1532 = vrot.lane.b32.xlu0 %v1293, 114
        %v1533 = vpop.permute.xlu0 %1532
        %v1534 = vsel %vm936, %v1531, %v1533
        %v1535 = vsel %vm936, %v1533, %v1531
        %v1536 = vmul.f32 %v1534, %v506
        %v1537 = vmul.f32 %v1535, %v507
        %1538 = vset.pattern.permute.xlu0 15
        %1539 = vperm.xlu0 %1538, %v1294
        %v1540 = vpop.permute.xlu0 %1539
        %v1542 = vmul.f32 %v1536, %v1540
        %v1543 = vmul.f32 %v1537, %v1540
        %v1544 = vadd.f32 %v1528, %v1542
        %v1545 = vadd.f32 %v1529, %v1543
        %1546 = vrot.lane.b32.xlu0 %v1292, 113
        %v1547 = vpop.permute.xlu0 %1546
        %1548 = vrot.lane.b32.xlu0 %v1293, 113
        %v1549 = vpop.permute.xlu0 %1548
        %v1550 = vsel %vm953, %v1547, %v1549
        %v1551 = vsel %vm953, %v1549, %v1547
        %v1552 = vmul.f32 %v1550, %v514
        %v1553 = vmul.f32 %v1551, %v515
        %1554 = vset.pattern.permute.xlu0 16
        %1555 = vperm.xlu0 %1554, %v1294
        %v1556 = vpop.permute.xlu0 %1555
        %v1558 = vmul.f32 %v1552, %v1556
        %v1559 = vmul.f32 %v1553, %v1556
        %v1560 = vadd.f32 %v1544, %v1558
        %v1561 = vadd.f32 %v1545, %v1559
        %1562 = vrot.lane.b32.xlu0 %v1292, 112
        %v1563 = vpop.permute.xlu0 %1562
        %1564 = vrot.lane.b32.xlu0 %v1293, 112
        %v1565 = vpop.permute.xlu0 %1564
        %v1566 = vsel %vm970, %v1563, %v1565
        %v1567 = vsel %vm970, %v1565, %v1563
        %v1568 = vmul.f32 %v1566, %v522
        %v1569 = vmul.f32 %v1567, %v523
        %1570 = vset.pattern.permute.xlu0 17
        %1571 = vperm.xlu0 %1570, %v1294
        %v1572 = vpop.permute.xlu0 %1571
        %v1574 = vmul.f32 %v1568, %v1572
        %v1575 = vmul.f32 %v1569, %v1572
        %v1576 = vadd.f32 %v1560, %v1574
        %v1577 = vadd.f32 %v1561, %v1575
        %1578 = vrot.lane.b32.xlu0 %v1292, 111
        %v1579 = vpop.permute.xlu0 %1578
        %1580 = vrot.lane.b32.xlu0 %v1293, 111
        %v1581 = vpop.permute.xlu0 %1580
        %v1582 = vsel %vm987, %v1579, %v1581
        %v1583 = vsel %vm987, %v1581, %v1579
        %v1584 = vmul.f32 %v1582, %v530
        %v1585 = vmul.f32 %v1583, %v531
        %1586 = vset.pattern.permute.xlu0 18
        %1587 = vperm.xlu0 %1586, %v1294
        %v1588 = vpop.permute.xlu0 %1587
        %v1590 = vmul.f32 %v1584, %v1588
        %v1591 = vmul.f32 %v1585, %v1588
        %v1592 = vadd.f32 %v1576, %v1590
        %v1593 = vadd.f32 %v1577, %v1591
        %1594 = vrot.lane.b32.xlu0 %v1292, 110
        %v1595 = vpop.permute.xlu0 %1594
        %1596 = vrot.lane.b32.xlu0 %v1293, 110
        %v1597 = vpop.permute.xlu0 %1596
        %v1598 = vsel %vm1004, %v1595, %v1597
        %v1599 = vsel %vm1004, %v1597, %v1595
        %v1600 = vmul.f32 %v1598, %v538
        %v1601 = vmul.f32 %v1599, %v539
        %1602 = vset.pattern.permute.xlu0 19
        %1603 = vperm.xlu0 %1602, %v1294
        %v1604 = vpop.permute.xlu0 %1603
        %v1606 = vmul.f32 %v1600, %v1604
        %v1607 = vmul.f32 %v1601, %v1604
        %v1608 = vadd.f32 %v1592, %v1606
        %v1609 = vadd.f32 %v1593, %v1607
        %1610 = vrot.lane.b32.xlu0 %v1292, 98
        %v1611 = vpop.permute.xlu0 %1610
        %1612 = vrot.lane.b32.xlu0 %v1293, 98
        %v1613 = vpop.permute.xlu0 %1612
        %v1614 = vsel %vm1021, %v1611, %v1613
        %v1615 = vsel %vm1021, %v1613, %v1611
        %v1616 = vmul.f32 %v1614, %v552
        %v1617 = vmul.f32 %v1615, %v553
        %1618 = vset.pattern.permute.xlu0 20
        %1619 = vperm.xlu0 %1618, %v1294
        %v1620 = vpop.permute.xlu0 %1619
        %v1622 = vmul.f32 %v1616, %v1620
        %v1623 = vmul.f32 %v1617, %v1620
        %v1624 = vadd.f32 %v1608, %v1622
        %v1625 = vadd.f32 %v1609, %v1623
        %1626 = vrot.lane.b32.xlu0 %v1292, 97
        %v1627 = vpop.permute.xlu0 %1626
        %1628 = vrot.lane.b32.xlu0 %v1293, 97
        %v1629 = vpop.permute.xlu0 %1628
        %v1630 = vsel %vm1038, %v1627, %v1629
        %v1631 = vsel %vm1038, %v1629, %v1627
        %v1632 = vmul.f32 %v1630, %v560
        %v1633 = vmul.f32 %v1631, %v561
        %1634 = vset.pattern.permute.xlu0 21
        %1635 = vperm.xlu0 %1634, %v1294
        %v1636 = vpop.permute.xlu0 %1635
        %v1638 = vmul.f32 %v1632, %v1636
        %v1639 = vmul.f32 %v1633, %v1636
        %v1640 = vadd.f32 %v1624, %v1638
        %v1641 = vadd.f32 %v1625, %v1639
        %1642 = vrot.lane.b32.xlu0 %v1292, 96
        %v1643 = vpop.permute.xlu0 %1642
        %1644 = vrot.lane.b32.xlu0 %v1293, 96
        %v1645 = vpop.permute.xlu0 %1644
        %v1646 = vsel %vm1055, %v1643, %v1645
        %v1647 = vsel %vm1055, %v1645, %v1643
        %v1648 = vmul.f32 %v1646, %v568
        %v1649 = vmul.f32 %v1647, %v569
        %1650 = vset.pattern.permute.xlu0 22
        %1651 = vperm.xlu0 %1650, %v1294
        %v1652 = vpop.permute.xlu0 %1651
        %v1654 = vmul.f32 %v1648, %v1652
        %v1655 = vmul.f32 %v1649, %v1652
        %v1656 = vadd.f32 %v1640, %v1654
        %v1657 = vadd.f32 %v1641, %v1655
        %1658 = vrot.lane.b32.xlu0 %v1292, 95
        %v1659 = vpop.permute.xlu0 %1658
        %1660 = vrot.lane.b32.xlu0 %v1293, 95
        %v1661 = vpop.permute.xlu0 %1660
        %v1662 = vsel %vm1072, %v1659, %v1661
        %v1663 = vsel %vm1072, %v1661, %v1659
        %v1664 = vmul.f32 %v1662, %v576
        %v1665 = vmul.f32 %v1663, %v577
        %1666 = vset.pattern.permute.xlu0 23
        %1667 = vperm.xlu0 %1666, %v1294
        %v1668 = vpop.permute.xlu0 %1667
        %v1670 = vmul.f32 %v1664, %v1668
        %v1671 = vmul.f32 %v1665, %v1668
        %v1672 = vadd.f32 %v1656, %v1670
        %v1673 = vadd.f32 %v1657, %v1671
        %1674 = vrot.lane.b32.xlu0 %v1292, 94
        %v1675 = vpop.permute.xlu0 %1674
        %1676 = vrot.lane.b32.xlu0 %v1293, 94
        %v1677 = vpop.permute.xlu0 %1676
        %v1678 = vsel %vm1089, %v1675, %v1677
        %v1679 = vsel %vm1089, %v1677, %v1675
        %v1680 = vmul.f32 %v1678, %v584
        %v1681 = vmul.f32 %v1679, %v585
        %1682 = vset.pattern.permute.xlu0 24
        %1683 = vperm.xlu0 %1682, %v1294
        %v1684 = vpop.permute.xlu0 %1683
        %v1686 = vmul.f32 %v1680, %v1684
        %v1687 = vmul.f32 %v1681, %v1684
        %v1688 = vadd.f32 %v1672, %v1686
        %v1689 = vadd.f32 %v1673, %v1687
        %1690 = vset.pattern.permute.xlu0 3
        %1691 = vperm.xlu0 %1690, %v1286
        %v1692 = vpop.permute.xlu0 %1691
        %v1694 = vadd.f32 %v1688, %v1692
        %v1695 = vadd.f32 %v1689, %v1692
        %v1696 = vadd.f32 %v1292, %v305
        %v1697 = vadd.f32 %v1293, %v306
        %v1698 = vadd.f32 %v1694, %v307
        %v1699 = vadd.f32 %v1695, %v308
        %v1700 = vpack.c.bf16 %v1698, %v1696
        %v1701 = vpack.c.bf16 %v1699, %v1697
        %v1704 = vunpack.c.l.b16 %v1700
        %v1705 = vunpack.c.l.b16 %v1701
        %v1706 = vunpack.c.h.b16 %v1700
        %v1707 = vunpack.c.h.b16 %v1701
        %v1708 = vpack.c.b16 %v1705, %v1704
        %v1709 = vpack.c.b16 %v1707, %v1706
        %1712 = vst [vmem:[%s297] sm:$0xff] %v1708
        %1713 = vst [vmem:[%s297 + $0x8] sm:$0xff] %v1709
        %s1714 = sand.u32 %s183, 1
        %s1715 = scalar_lea.sflag [#allocation4], %s1714
        %s1716 = sand.u32 %s183, 1
        %s1717 = smul.addr %s1716, 16
        %s1718 = scalar_lea.vmem [#allocation7], %s1717
        // Predicated region
        $region57: #{tpu_custom_call.1} parent=47 // pred_check
          %p1719 = pneg %p193
        $region58: #{tpu_custom_call.1} parent=47 // pred_check_branch
          %1721 = sbr.rel (%p1719) target = $region60
        $region59: #{tpu_custom_call.1} parent=47 // pred_region
          %s1723 = ssub.s32 256, 256
          %1724 = vsyncadd %s1715, %s1723
          %s1725 = smul.addr %s23, 4
          %s1726 = smul.addr %s1725, 64
          %s1727 = scalar_lea.hbm %s7, %s1726
          %s1728 = sshll.u32 %s1718, 4
          %s1729 = int_to_ptr.vmem [resolvable:$true] %s1728
          %1734 = dma.vmem_to_hbm [thread:$0]  %s1729, 256, %s1727, %s1715, 128, 128, 8
        $region60: #{tpu_custom_call.1} parent=47 // pred_fallthru
          _
      $region48: #{tpu_custom_call.1} parent=5 // pred_fallthru
        _
      %p1735 = scmp.le.s32.totalorder 2, %s18
      // Predicated region
      $region61: #{tpu_custom_call.1} parent=5 // pred_check
        %p1736 = pneg %p1735
      $region62: #{tpu_custom_call.1} parent=5 // pred_check_branch
        %1738 = sbr.rel (%p1736) target = $region64
      $region63: #{tpu_custom_call.1} parent=5 // pred_region
        %s1739 = ssub.s32 %s18, 2
        // Predicated region
        $region65: #{tpu_custom_call.1} parent=63 // pred_check
          %p1740 = pneg %p199
        $region66: #{tpu_custom_call.1} parent=63 // pred_check_branch
          %1742 = sbr.rel (%p1740) target = $region68
        $region67: #{tpu_custom_call.1} parent=63 // pred_region
          %s1743 = sand.u32 %s184, 1
          %s1744 = scalar_lea.sflag [#allocation4], %s1743
          %s1745 = sand.u32 %s184, 1
          %s1746 = smul.addr %s1745, 16
          %s1747 = scalar_lea.vmem [#allocation7], %s1746
          %1748 = dma.done %s1744, 256
        $region68: #{tpu_custom_call.1} parent=63 // pred_fallthru
          _
      $region64: #{tpu_custom_call.1} parent=5 // pred_fallthru
        _
    $region6: #{tpu_custom_call.1} parent=1 // loop_footer
      %s22 = sadd.s32 1, %s18
    $region7: #{tpu_custom_call.1} parent=1 // loop_footer_branch
      %17 = sbr.rel target = $region3
    $region8: #{tpu_custom_call.1} parent=1 // loop_exit
      _
    %1749 = vsyncpa [#allocation3], 1
    %s1750 = scalar_lea.sflag [#allocation3], 1
    %1751 = vsyncpa %s1750, 1
    %1752 = vsyncpa [#allocation6], 1
    %1753 = vsyncpa [#allocation4], 1
    %s1754 = scalar_lea.sflag [#allocation4], 1
    %1755 = vsyncpa %s1754, 1

</llo_original>
